<compile_context>
chip_gen: v7x
topology: tpu7x:2x2x1
jax: 0.10.0
libtpu: 0.0.40
codegen_flags: <defaults>
</compile_context>

<pallas_src>
import functools

import jax
import jax.numpy as jnp
from jax.experimental import pallas as pl
from jax.experimental.pallas import tpu as pltpu

# ---------------- small synthetic-BERT config ----------------
B, S, H = 2, 8, 32                 # batch, seq len, hidden_size
NUM_HEADS, HEAD_DIM = 2, 16
INTERMEDIATE = 64
NUM_LAYERS = 2
NUM_CLASSES = 7
VOCAB, TYPE_VOCAB = 50, 2
LN_EPS = 1e-12
PAD_CLASSES = 128                  # lane-dense logits tile, sliced to 7 outside

LAYER_WEIGHT_NAMES = ["wq", "bq", "wk", "bk", "wv", "bv", "wo", "bo",
                      "g1", "be1", "w1", "bf1", "w2", "bf2", "g2", "be2"]


def _layer_norm(x, gamma, beta):
    mu = jnp.mean(x, axis=-1, keepdims=True)
    var = jnp.mean(jnp.square(x - mu), axis=-1, keepdims=True)
    return (x - mu) * jax.lax.rsqrt(var + LN_EPS) * gamma + beta


# -------- fused kernel: mask + emb-LN + encoder stack + pooler + classifier --------
def _bert_kernel(vl_ref,                       # scalar prefetch, SMEM (B,)
                 x_emb_ref, emb_g_ref, emb_b_ref,
                 wq_ref, bq_ref, wk_ref, bk_ref, wv_ref, bv_ref,
                 wo_ref, bo_ref, g1_ref, be1_ref,
                 w1_ref, bf1_ref, w2_ref, bf2_ref, g2_ref, be2_ref,
                 wp_ref, bp_ref, wc_ref, bc_ref,
                 out_ref, x_sc):
    b = pl.program_id(0)          # example index ("parallel")
    layer = pl.program_id(1)      # layer index ("arbitrary")

    # ---- first layer step: embedding LayerNorm into persistent VMEM x ----
    @pl.when(layer == 0)
    def _():
        x_sc[...] = _layer_norm(x_emb_ref[0].astype(jnp.float32),
                                emb_g_ref[...], emb_b_ref[...])

    x = x_sc[...]                                          # (S, H) f32
    x_bf = x.astype(jnp.bfloat16)
    x_h = jnp.broadcast_to(x_bf[None], (NUM_HEADS, S, H))  # head-batched view

    # ---- additive attention bias from scalar-prefetched valid_length ----
    col = jax.lax.broadcasted_iota(jnp.int32, (1, 1, S), 2)
    bias = jnp.where(col < vl_ref[b], 0.0, -10000.0).astype(jnp.float32)

    # ---- multi-head self-attention (head axis = einsum batch axis) ----
    scale = jnp.float32(1.0 / (HEAD_DIM ** 0.5))
    q = (jnp.einsum("hsk,hkd->hsd", x_h, wq_ref[0],
                    preferred_element_type=jnp.float32) + bq_ref[0]) * scale
    k = jnp.einsum("hsk,hkd->hsd", x_h, wk_ref[0],
                   preferred_element_type=jnp.float32) + bk_ref[0]
    v = jnp.einsum("hsk,hkd->hsd", x_h, wv_ref[0],
                   preferred_element_type=jnp.float32) + bv_ref[0]

    scores = jnp.einsum("hqd,hkd->hqk",
                        q.astype(jnp.bfloat16), k.astype(jnp.bfloat16),
                        preferred_element_type=jnp.float32) + bias
    probs = jax.nn.softmax(scores, axis=-1)                # f32, (NH, S, S)
    ctx = jnp.einsum("hqk,hkd->hqd",
                     probs.astype(jnp.bfloat16), v.astype(jnp.bfloat16),
                     preferred_element_type=jnp.float32)   # (NH, S, HD)
    # output projection: one head-batched matmul + cross-head add
    # (mathematically identical to concat(heads) @ wo)
    attn = jnp.einsum("hqd,hdm->hqm",
                      ctx.astype(jnp.bfloat16), wo_ref[0],
                      preferred_element_type=jnp.float32).sum(axis=0) + bo_ref[0]

    # ---- residual + LN + GELU FFN + residual + LN ----
    h1 = _layer_norm(x + attn, g1_ref[0], be1_ref[0])
    # TODO(synk): reference BERT uses exact erf-GELU; tanh approximation used here.
    inter = jax.nn.gelu(
        jnp.dot(h1.astype(jnp.bfloat16), w1_ref[0],
                preferred_element_type=jnp.float32) + bf1_ref[0],
        approximate=True)
    ffn = jnp.dot(inter.astype(jnp.bfloat16), w2_ref[0],
                  preferred_element_type=jnp.float32) + bf2_ref[0]
    out_x = _layer_norm(h1 + ffn, g2_ref[0], be2_ref[0])
    x_sc[...] = out_x

    # ---- last layer step: BERT pooler + classifier (lane-dense logits) ----
    @pl.when(layer == NUM_LAYERS - 1)
    def _():
        cls = out_x[0:1, :]                                # [CLS] token, (1, H)
        pooled = jnp.tanh(
            jnp.dot(cls.astype(jnp.bfloat16), wp_ref[...],
                    preferred_element_type=jnp.float32) + bp_ref[...])
        # TODO(synk): dropout (dr_rate) omitted — identity at inference time.
        logits = jnp.dot(pooled.astype(jnp.bfloat16), wc_ref[...],
                         preferred_element_type=jnp.float32) + bc_ref[...]
        out_ref[0] = jnp.broadcast_to(logits, (8, PAD_CLASSES))


# ---------------- wrapper: one pallas_call for the whole forward ----------------
def bert_classifier_forward(params, token_ids, valid_length, segment_ids):
    # BERT embeddings: gathers are plain-JAX glue
    x_emb = (jnp.take(params["word_emb"], token_ids, axis=0)
             + jnp.take(params["type_emb"], segment_ids, axis=0)
             + params["pos_emb"][None, :, :])                       # (B, S, H) f32

    # lane-dense padded classifier weights (sliced back to NUM_CLASSES below)
    wc_pad = jnp.zeros((H, PAD_CLASSES), jnp.bfloat16
                       ).at[:, :NUM_CLASSES].set(params["wc"].astype(jnp.bfloat16))
    bc_pad = jnp.zeros((1, PAD_CLASSES), jnp.float32
                       ).at[:, :NUM_CLASSES].set(params["bc"])

    layer_args = [params[n] for n in LAYER_WEIGHT_NAMES]            # stacked (L, ...)

    def inv(a):                       # grid-invariant, full-array block
        nd = a.ndim
        return pl.BlockSpec(a.shape, lambda b, l, vl: (0,) * nd)

    def per_layer(a):                 # one layer slice per "arbitrary" step
        nd = a.ndim
        return pl.BlockSpec((1,) + a.shape[1:],
                            lambda b, l, vl: (l,) + (0,) * (nd - 1))

    in_specs = ([pl.BlockSpec((1, S, H), lambda b, l, vl: (b, 0, 0)),
                 inv(params["emb_g"]), inv(params["emb_b"])]
                + [per_layer(a) for a in layer_args]
                + [inv(params["wp"]), inv(params["bp"]), inv(wc_pad), inv(bc_pad)])

    grid_spec = pltpu.PrefetchScalarGridSpec(
        num_scalar_prefetch=1,
        grid=(B, NUM_LAYERS),
        in_specs=in_specs,
        out_specs=pl.BlockSpec((1, 8, PAD_CLASSES), lambda b, l, vl: (b, 0, 0)),
        scratch_shapes=[pltpu.VMEM((S, H), jnp.float32)],           # persistent x
    )

    out = pl.pallas_call(
        _bert_kernel,
        out_shape=jax.ShapeDtypeStruct((B, 8, PAD_CLASSES), jnp.float32),
        grid_spec=grid_spec,
        compiler_params=pltpu.CompilerParams(
            dimension_semantics=("parallel", "arbitrary")),
    )(valid_length.astype(jnp.int32), x_emb,
      params["emb_g"], params["emb_b"], *layer_args,
      params["wp"], params["bp"], wc_pad, bc_pad)

    return out[:, 0, :NUM_CLASSES]                                  # (B, 7) f32


# ---------------- deterministic parameter init ----------------
def init_params(key):
    keys = iter(jax.random.split(key, 32))

    def w(shape, dtype=jnp.bfloat16):
        return (0.02 * jax.random.normal(next(keys), shape, jnp.float32)).astype(dtype)

    L, NH, HD = NUM_LAYERS, NUM_HEADS, HEAD_DIM
    return {
        # embeddings (f32, gathered outside the kernel)
        "word_emb": w((VOCAB, H), jnp.float32),
        "type_emb": w((TYPE_VOCAB, H), jnp.float32),
        "pos_emb": w((S, H), jnp.float32),
        "emb_g": jnp.ones((1, H), jnp.float32),
        "emb_b": jnp.zeros((1, H), jnp.float32),
        # encoder stack, stacked over layers; matmul weights bf16, head-major
        "wq": w((L, NH, H, HD)), "bq": jnp.zeros((L, NH, 1, HD), jnp.float32),
        "wk": w((L, NH, H, HD)), "bk": jnp.zeros((L, NH, 1, HD), jnp.float32),
        "wv": w((L, NH, H, HD)), "bv": jnp.zeros((L, NH, 1, HD), jnp.float32),
        "wo": w((L, NH, HD, H)), "bo": jnp.zeros((L, 1, H), jnp.float32),
        "g1": jnp.ones((L, 1, H), jnp.float32), "be1": jnp.zeros((L, 1, H), jnp.float32),
        "w1": w((L, H, INTERMEDIATE)), "bf1": jnp.zeros((L, 1, INTERMEDIATE), jnp.float32),
        "w2": w((L, INTERMEDIATE, H)), "bf2": jnp.zeros((L, 1, H), jnp.float32),
        "g2": jnp.ones((L, 1, H), jnp.float32), "be2": jnp.zeros((L, 1, H), jnp.float32),
        # BERT pooler + nn.Linear(hidden_size -> num_classes) classifier
        "wp": w((H, H)), "bp": jnp.zeros((1, H), jnp.float32),
        "wc": w((H, NUM_CLASSES), jnp.float32),
        "bc": jnp.zeros((1, NUM_CLASSES), jnp.float32),
    }


if __name__ == "__main__":
    key = jax.random.PRNGKey(0)
    k_tok, k_seg, k_param = jax.random.split(key, 3)
    token_ids = jax.random.randint(k_tok, (B, S), 0, VOCAB, dtype=jnp.int32)
    segment_ids = jax.random.randint(k_seg, (B, S), 0, TYPE_VOCAB, dtype=jnp.int32)
    valid_length = jnp.array([5, 8], dtype=jnp.int32)

    params = init_params(k_param)
    fwd = jax.jit(functools.partial(bert_classifier_forward, params))
    logits = fwd(token_ids, valid_length, segment_ids)
    jax.block_until_ready(logits)
    assert logits.shape == (B, NUM_CLASSES) and logits.dtype == jnp.float32
    print("KERNEL_OK")
</pallas_src>

<mosaic_0001>
module attributes {stable_mosaic.version = 11 : i64} {
  func.func @_bert_kernel(%arg0: i32, %arg1: i32, %arg2: memref<2xi32, #tpu.memory_space<smem>>, %arg3: memref<1x8x32xf32, #tpu.memory_space<vmem>>, %arg4: memref<1x32xf32, #tpu.memory_space<vmem>>, %arg5: memref<1x32xf32, #tpu.memory_space<vmem>>, %arg6: memref<1x2x32x16xbf16, #tpu.memory_space<vmem>>, %arg7: memref<1x2x1x16xf32, #tpu.memory_space<vmem>>, %arg8: memref<1x2x32x16xbf16, #tpu.memory_space<vmem>>, %arg9: memref<1x2x1x16xf32, #tpu.memory_space<vmem>>, %arg10: memref<1x2x32x16xbf16, #tpu.memory_space<vmem>>, %arg11: memref<1x2x1x16xf32, #tpu.memory_space<vmem>>, %arg12: memref<1x2x16x32xbf16, #tpu.memory_space<vmem>>, %arg13: memref<1x1x32xf32, #tpu.memory_space<vmem>>, %arg14: memref<1x1x32xf32, #tpu.memory_space<vmem>>, %arg15: memref<1x1x32xf32, #tpu.memory_space<vmem>>, %arg16: memref<1x32x64xbf16, #tpu.memory_space<vmem>>, %arg17: memref<1x1x64xf32, #tpu.memory_space<vmem>>, %arg18: memref<1x64x32xbf16, #tpu.memory_space<vmem>>, %arg19: memref<1x1x32xf32, #tpu.memory_space<vmem>>, %arg20: memref<1x1x32xf32, #tpu.memory_space<vmem>>, %arg21: memref<1x1x32xf32, #tpu.memory_space<vmem>>, %arg22: memref<32x32xbf16, #tpu.memory_space<vmem>>, %arg23: memref<1x32xf32, #tpu.memory_space<vmem>>, %arg24: memref<32x128xbf16, #tpu.memory_space<vmem>>, %arg25: memref<1x128xf32, #tpu.memory_space<vmem>>, %arg26: memref<1x8x128xf32, #tpu.memory_space<vmem>>, %arg27: memref<8x32xf32, #tpu.memory_space<vmem>>) attributes {dimension_semantics = [#tpu.dimension_semantics<parallel>, #tpu.dimension_semantics<arbitrary>], iteration_bounds = array<i64: 2, 2>, scalar_prefetch = 1 : i64, scratch_operands = 1 : i64, tpu.core_type = #tpu.core_type<tc>, window_params = [{transform_indices = @transform_0, window_bounds = array<i64: 1, 8, 32>}, {pipeline_mode = #tpu.pipeline_mode<synchronous>, transform_indices = @transform_1, window_bounds = array<i64: 1, 32>}, {pipeline_mode = #tpu.pipeline_mode<synchronous>, transform_indices = @transform_2, window_bounds = array<i64: 1, 32>}, {transform_indices = @transform_3, window_bounds = array<i64: 1, 2, 32, 16>}, {transform_indices = @transform_4, window_bounds = array<i64: 1, 2, 1, 16>}, {transform_indices = @transform_5, window_bounds = array<i64: 1, 2, 32, 16>}, {transform_indices = @transform_6, window_bounds = array<i64: 1, 2, 1, 16>}, {transform_indices = @transform_7, window_bounds = array<i64: 1, 2, 32, 16>}, {transform_indices = @transform_8, window_bounds = array<i64: 1, 2, 1, 16>}, {transform_indices = @transform_9, window_bounds = array<i64: 1, 2, 16, 32>}, {transform_indices = @transform_10, window_bounds = array<i64: 1, 1, 32>}, {transform_indices = @transform_11, window_bounds = array<i64: 1, 1, 32>}, {transform_indices = @transform_12, window_bounds = array<i64: 1, 1, 32>}, {transform_indices = @transform_13, window_bounds = array<i64: 1, 32, 64>}, {transform_indices = @transform_14, window_bounds = array<i64: 1, 1, 64>}, {transform_indices = @transform_15, window_bounds = array<i64: 1, 64, 32>}, {transform_indices = @transform_16, window_bounds = array<i64: 1, 1, 32>}, {transform_indices = @transform_17, window_bounds = array<i64: 1, 1, 32>}, {transform_indices = @transform_18, window_bounds = array<i64: 1, 1, 32>}, {pipeline_mode = #tpu.pipeline_mode<synchronous>, transform_indices = @transform_19, window_bounds = array<i64: 32, 32>}, {pipeline_mode = #tpu.pipeline_mode<synchronous>, transform_indices = @transform_20, window_bounds = array<i64: 1, 32>}, {pipeline_mode = #tpu.pipeline_mode<synchronous>, transform_indices = @transform_21, window_bounds = array<i64: 32, 128>}, {pipeline_mode = #tpu.pipeline_mode<synchronous>, transform_indices = @transform_22, window_bounds = array<i64: 1, 128>}, {transform_indices = @transform_23, window_bounds = array<i64: 1, 8, 128>}]} {
    %c0_i32 = arith.constant 0 : i32
    %0 = arith.cmpi eq, %arg1, %c0_i32 : i32
    %1 = arith.extui %0 : i1 to i32
    %c0_i32_0 = arith.constant 0 : i32
    %2 = arith.cmpi ne, %1, %c0_i32_0 : i32
    scf.if %2 {
      %c0_88 = arith.constant 0 : index
      %c0_89 = arith.constant 0 : index
      %c0_90 = arith.constant 0 : index
      %154 = vector.load %arg3[%c0_88, %c0_89, %c0_90] : memref<1x8x32xf32, #tpu.memory_space<vmem>>, vector<1x8x32xf32>
      %155 = vector.shape_cast %154 : vector<1x8x32xf32> to vector<8x32xf32>
      %c0_91 = arith.constant 0 : index
      %c0_92 = arith.constant 0 : index
      %156 = vector.load %arg4[%c0_91, %c0_92] : memref<1x32xf32, #tpu.memory_space<vmem>>, vector<1x32xf32>
      %c0_93 = arith.constant 0 : index
      %c0_94 = arith.constant 0 : index
      %157 = vector.load %arg5[%c0_93, %c0_94] : memref<1x32xf32, #tpu.memory_space<vmem>>, vector<1x32xf32>
      %cst_95 = arith.constant dense<0.000000e+00> : vector<8xf32>
      %158 = vector.multi_reduction <add>, %155, %cst_95 [1] : vector<8x32xf32> to vector<8xf32>
      %159 = vector.shape_cast %158 : vector<8xf32> to vector<8x1xf32>
      %cst_96 = arith.constant 3.200000e+01 : f32
      %160 = vector.broadcast %cst_96 : f32 to vector<8x1xf32>
      %161 = arith.divf %159, %160 : vector<8x1xf32>
      %162 = vector.broadcast %161 : vector<8x1xf32> to vector<8x32xf32>
      %163 = arith.subf %155, %162 : vector<8x32xf32>
      %164 = arith.mulf %163, %163 : vector<8x32xf32>
      %cst_97 = arith.constant dense<0.000000e+00> : vector<8xf32>
      %165 = vector.multi_reduction <add>, %164, %cst_97 [1] : vector<8x32xf32> to vector<8xf32>
      %166 = vector.shape_cast %165 : vector<8xf32> to vector<8x1xf32>
      %cst_98 = arith.constant 3.200000e+01 : f32
      %167 = vector.broadcast %cst_98 : f32 to vector<8x1xf32>
      %168 = arith.divf %166, %167 : vector<8x1xf32>
      %169 = vector.broadcast %161 : vector<8x1xf32> to vector<8x32xf32>
      %170 = arith.subf %155, %169 : vector<8x32xf32>
      %cst_99 = arith.constant 9.99999996E-13 : f32
      %171 = vector.broadcast %cst_99 : f32 to vector<8x1xf32>
      %172 = arith.addf %168, %171 : vector<8x1xf32>
      %173 = math.rsqrt %172 : vector<8x1xf32>
      %174 = vector.broadcast %173 : vector<8x1xf32> to vector<8x32xf32>
      %175 = arith.mulf %170, %174 : vector<8x32xf32>
      %176 = vector.broadcast %156 : vector<1x32xf32> to vector<8x32xf32>
      %177 = arith.mulf %175, %176 : vector<8x32xf32>
      %178 = vector.broadcast %157 : vector<1x32xf32> to vector<8x32xf32>
      %179 = arith.addf %177, %178 : vector<8x32xf32>
      %c0_100 = arith.constant 0 : index
      %c0_101 = arith.constant 0 : index
      %180 = vector.load %arg27[%c0_100, %c0_101] : memref<8x32xf32, #tpu.memory_space<vmem>>, vector<8x32xf32>
      tpu.vector_store %arg27[%c0_100, %c0_101], %179 {strides = array<i32>} : memref<8x32xf32, #tpu.memory_space<vmem>>, vector<8x32xf32>,
    } else {
    }
    %c0 = arith.constant 0 : index
    %c0_1 = arith.constant 0 : index
    %3 = vector.load %arg27[%c0, %c0_1] : memref<8x32xf32, #tpu.memory_space<vmem>>, vector<8x32xf32>
    %4 = arith.truncf %3 : vector<8x32xf32> to vector<8x32xbf16>
    %5 = vector.shape_cast %4 : vector<8x32xbf16> to vector<1x8x32xbf16>
    %6 = vector.shape_cast %5 : vector<1x8x32xbf16> to vector<1x8x32xbf16>
    %7 = vector.broadcast %6 : vector<1x8x32xbf16> to vector<2x8x32xbf16>
    %8 = tpu.iota {dimensions = array<i32: 2>} : vector<1x1x8xi32>
    %9 = arith.index_cast %arg0 : i32 to index
    %10 = memref.load %arg2[%9] : memref<2xi32, #tpu.memory_space<smem>>
    %11 = vector.broadcast %10 : i32 to vector<1x1x8xi32>
    %12 = arith.cmpi slt, %8, %11 : vector<1x1x8xi32>
    %cst = arith.constant 0.000000e+00 : f32
    %cst_2 = arith.constant -1.000000e+04 : f32
    %13 = vector.broadcast %cst : f32 to vector<1x1x8xf32>
    %14 = vector.broadcast %cst_2 : f32 to vector<1x1x8xf32>
    %15 = arith.select %12, %13, %14 : vector<1x1x8xi1>, vector<1x1x8xf32>
    %c0_3 = arith.constant 0 : index
    %c0_4 = arith.constant 0 : index
    %c0_5 = arith.constant 0 : index
    %c0_6 = arith.constant 0 : index
    %16 = vector.load %arg6[%c0_3, %c0_4, %c0_5, %c0_6] : memref<1x2x32x16xbf16, #tpu.memory_space<vmem>>, vector<1x2x32x16xbf16>
    %17 = vector.shape_cast %16 : vector<1x2x32x16xbf16> to vector<2x32x16xbf16>
    "tpu.trace_start"() <{level = 10 : i32, message = "hsk,hkd->hsd"}> : () -> ()
    %cst_7 = arith.constant dense<0.000000e+00> : vector<2x8x16xf32>
    %18 = tpu.matmul %7, %17, %cst_7 {dimension_numbers = #tpu.dot_dimension_numbers<[2], [1], [1], [2], [0, 0, 0, 1, 1, 2], [0], [0]>} : vector<2x8x32xbf16>, vector<2x32x16xbf16>, vector<2x8x16xf32> -> vector<2x8x16xf32>
    "tpu.trace_stop"() : () -> ()
    %c0_8 = arith.constant 0 : index
    %c0_9 = arith.constant 0 : index
    %c0_10 = arith.constant 0 : index
    %c0_11 = arith.constant 0 : index
    %19 = vector.load %arg7[%c0_8, %c0_9, %c0_10, %c0_11] : memref<1x2x1x16xf32, #tpu.memory_space<vmem>>, vector<1x2x1x16xf32>
    %20 = vector.shape_cast %19 : vector<1x2x1x16xf32> to vector<2x1x16xf32>
    %21 = vector.broadcast %20 : vector<2x1x16xf32> to vector<2x8x16xf32>
    %22 = arith.addf %18, %21 : vector<2x8x16xf32>
    %cst_12 = arith.constant 2.500000e-01 : f32
    %23 = vector.broadcast %cst_12 : f32 to vector<2x8x16xf32>
    %24 = arith.mulf %22, %23 : vector<2x8x16xf32>
    %c0_13 = arith.constant 0 : index
    %c0_14 = arith.constant 0 : index
    %c0_15 = arith.constant 0 : index
    %c0_16 = arith.constant 0 : index
    %25 = vector.load %arg8[%c0_13, %c0_14, %c0_15, %c0_16] : memref<1x2x32x16xbf16, #tpu.memory_space<vmem>>, vector<1x2x32x16xbf16>
    %26 = vector.shape_cast %25 : vector<1x2x32x16xbf16> to vector<2x32x16xbf16>
    "tpu.trace_start"() <{level = 10 : i32, message = "hsk,hkd->hsd"}> : () -> ()
    %cst_17 = arith.constant dense<0.000000e+00> : vector<2x8x16xf32>
    %27 = tpu.matmul %7, %26, %cst_17 {dimension_numbers = #tpu.dot_dimension_numbers<[2], [1], [1], [2], [0, 0, 0, 1, 1, 2], [0], [0]>} : vector<2x8x32xbf16>, vector<2x32x16xbf16>, vector<2x8x16xf32> -> vector<2x8x16xf32>
    "tpu.trace_stop"() : () -> ()
    %c0_18 = arith.constant 0 : index
    %c0_19 = arith.constant 0 : index
    %c0_20 = arith.constant 0 : index
    %c0_21 = arith.constant 0 : index
    %28 = vector.load %arg9[%c0_18, %c0_19, %c0_20, %c0_21] : memref<1x2x1x16xf32, #tpu.memory_space<vmem>>, vector<1x2x1x16xf32>
    %29 = vector.shape_cast %28 : vector<1x2x1x16xf32> to vector<2x1x16xf32>
    %30 = vector.broadcast %29 : vector<2x1x16xf32> to vector<2x8x16xf32>
    %31 = arith.addf %27, %30 : vector<2x8x16xf32>
    %c0_22 = arith.constant 0 : index
    %c0_23 = arith.constant 0 : index
    %c0_24 = arith.constant 0 : index
    %c0_25 = arith.constant 0 : index
    %32 = vector.load %arg10[%c0_22, %c0_23, %c0_24, %c0_25] : memref<1x2x32x16xbf16, #tpu.memory_space<vmem>>, vector<1x2x32x16xbf16>
    %33 = vector.shape_cast %32 : vector<1x2x32x16xbf16> to vector<2x32x16xbf16>
    "tpu.trace_start"() <{level = 10 : i32, message = "hsk,hkd->hsd"}> : () -> ()
    %cst_26 = arith.constant dense<0.000000e+00> : vector<2x8x16xf32>
    %34 = tpu.matmul %7, %33, %cst_26 {dimension_numbers = #tpu.dot_dimension_numbers<[2], [1], [1], [2], [0, 0, 0, 1, 1, 2], [0], [0]>} : vector<2x8x32xbf16>, vector<2x32x16xbf16>, vector<2x8x16xf32> -> vector<2x8x16xf32>
    "tpu.trace_stop"() : () -> ()
    %c0_27 = arith.constant 0 : index
    %c0_28 = arith.constant 0 : index
    %c0_29 = arith.constant 0 : index
    %c0_30 = arith.constant 0 : index
    %35 = vector.load %arg11[%c0_27, %c0_28, %c0_29, %c0_30] : memref<1x2x1x16xf32, #tpu.memory_space<vmem>>, vector<1x2x1x16xf32>
    %36 = vector.shape_cast %35 : vector<1x2x1x16xf32> to vector<2x1x16xf32>
    %37 = vector.broadcast %36 : vector<2x1x16xf32> to vector<2x8x16xf32>
    %38 = arith.addf %34, %37 : vector<2x8x16xf32>
    %39 = arith.truncf %24 : vector<2x8x16xf32> to vector<2x8x16xbf16>
    %40 = arith.truncf %31 : vector<2x8x16xf32> to vector<2x8x16xbf16>
    "tpu.trace_start"() <{level = 10 : i32, message = "hqd,hkd->hqk"}> : () -> ()
    %cst_31 = arith.constant dense<0.000000e+00> : vector<2x8x8xf32>
    %41 = tpu.matmul %39, %40, %cst_31 {dimension_numbers = #tpu.dot_dimension_numbers<[2], [2], [1], [1], [0, 0, 0, 1, 1, 1], [0], [0]>} : vector<2x8x16xbf16>, vector<2x8x16xbf16>, vector<2x8x8xf32> -> vector<2x8x8xf32>
    "tpu.trace_stop"() : () -> ()
    %42 = vector.broadcast %15 : vector<1x1x8xf32> to vector<2x8x8xf32>
    %43 = arith.addf %41, %42 : vector<2x8x8xf32>
    %cst_32 = arith.constant dense<0xFF800000> : vector<2x8xf32>
    %44 = vector.multi_reduction <maximumf>, %43, %cst_32 [2] : vector<2x8x8xf32> to vector<2x8xf32>
    %cst_33 = arith.constant 0xFF800000 : f32
    %45 = vector.broadcast %cst_33 : f32 to vector<2x8xf32>
    %46 = arith.maximumf %45, %44 : vector<2x8xf32>
    %47 = vector.shape_cast %46 : vector<2x8xf32> to vector<2x8x1xf32>
    %48 = vector.broadcast %47 : vector<2x8x1xf32> to vector<2x8x8xf32>
    %49 = arith.subf %43, %48 : vector<2x8x8xf32>
    %50 = math.exp %49 : vector<2x8x8xf32>
    %cst_34 = arith.constant dense<0.000000e+00> : vector<2x8xf32>
    %51 = vector.multi_reduction <add>, %50, %cst_34 [2] : vector<2x8x8xf32> to vector<2x8xf32>
    %52 = vector.shape_cast %51 : vector<2x8xf32> to vector<2x8x1xf32>
    %53 = vector.broadcast %52 : vector<2x8x1xf32> to vector<2x8x8xf32>
    %54 = arith.divf %50, %53 : vector<2x8x8xf32>
    %55 = arith.truncf %54 : vector<2x8x8xf32> to vector<2x8x8xbf16>
    %56 = arith.truncf %38 : vector<2x8x16xf32> to vector<2x8x16xbf16>
    "tpu.trace_start"() <{level = 10 : i32, message = "hqk,hkd->hqd"}> : () -> ()
    %cst_35 = arith.constant dense<0.000000e+00> : vector<2x8x16xf32>
    %57 = tpu.matmul %55, %56, %cst_35 {dimension_numbers = #tpu.dot_dimension_numbers<[2], [1], [1], [2], [0, 0, 0, 1, 1, 2], [0], [0]>} : vector<2x8x8xbf16>, vector<2x8x16xbf16>, vector<2x8x16xf32> -> vector<2x8x16xf32>
    "tpu.trace_stop"() : () -> ()
    %58 = arith.truncf %57 : vector<2x8x16xf32> to vector<2x8x16xbf16>
    %c0_36 = arith.constant 0 : index
    %c0_37 = arith.constant 0 : index
    %c0_38 = arith.constant 0 : index
    %c0_39 = arith.constant 0 : index
    %59 = vector.load %arg12[%c0_36, %c0_37, %c0_38, %c0_39] : memref<1x2x16x32xbf16, #tpu.memory_space<vmem>>, vector<1x2x16x32xbf16>
    %60 = vector.shape_cast %59 : vector<1x2x16x32xbf16> to vector<2x16x32xbf16>
    "tpu.trace_start"() <{level = 10 : i32, message = "hqd,hdm->hqm"}> : () -> ()
    %cst_40 = arith.constant dense<0.000000e+00> : vector<2x8x32xf32>
    %61 = tpu.matmul %58, %60, %cst_40 {dimension_numbers = #tpu.dot_dimension_numbers<[2], [1], [1], [2], [0, 0, 0, 1, 1, 2], [0], [0]>} : vector<2x8x16xbf16>, vector<2x16x32xbf16>, vector<2x8x32xf32> -> vector<2x8x32xf32>
    "tpu.trace_stop"() : () -> ()
    %cst_41 = arith.constant dense<0.000000e+00> : vector<8x32xf32>
    %62 = vector.multi_reduction <add>, %61, %cst_41 [0] : vector<2x8x32xf32> to vector<8x32xf32>
    %c0_42 = arith.constant 0 : index
    %c0_43 = arith.constant 0 : index
    %c0_44 = arith.constant 0 : index
    %63 = vector.load %arg13[%c0_42, %c0_43, %c0_44] : memref<1x1x32xf32, #tpu.memory_space<vmem>>, vector<1x1x32xf32>
    %64 = vector.shape_cast %63 : vector<1x1x32xf32> to vector<1x32xf32>
    %65 = vector.broadcast %64 : vector<1x32xf32> to vector<8x32xf32>
    %66 = arith.addf %62, %65 : vector<8x32xf32>
    %67 = arith.addf %3, %66 : vector<8x32xf32>
    %c0_45 = arith.constant 0 : index
    %c0_46 = arith.constant 0 : index
    %c0_47 = arith.constant 0 : index
    %68 = vector.load %arg14[%c0_45, %c0_46, %c0_47] : memref<1x1x32xf32, #tpu.memory_space<vmem>>, vector<1x1x32xf32>
    %69 = vector.shape_cast %68 : vector<1x1x32xf32> to vector<1x32xf32>
    %c0_48 = arith.constant 0 : index
    %c0_49 = arith.constant 0 : index
    %c0_50 = arith.constant 0 : index
    %70 = vector.load %arg15[%c0_48, %c0_49, %c0_50] : memref<1x1x32xf32, #tpu.memory_space<vmem>>, vector<1x1x32xf32>
    %71 = vector.shape_cast %70 : vector<1x1x32xf32> to vector<1x32xf32>
    %cst_51 = arith.constant dense<0.000000e+00> : vector<8xf32>
    %72 = vector.multi_reduction <add>, %67, %cst_51 [1] : vector<8x32xf32> to vector<8xf32>
    %73 = vector.shape_cast %72 : vector<8xf32> to vector<8x1xf32>
    %cst_52 = arith.constant 3.200000e+01 : f32
    %74 = vector.broadcast %cst_52 : f32 to vector<8x1xf32>
    %75 = arith.divf %73, %74 : vector<8x1xf32>
    %76 = vector.broadcast %75 : vector<8x1xf32> to vector<8x32xf32>
    %77 = arith.subf %67, %76 : vector<8x32xf32>
    %78 = arith.mulf %77, %77 : vector<8x32xf32>
    %cst_53 = arith.constant dense<0.000000e+00> : vector<8xf32>
    %79 = vector.multi_reduction <add>, %78, %cst_53 [1] : vector<8x32xf32> to vector<8xf32>
    %80 = vector.shape_cast %79 : vector<8xf32> to vector<8x1xf32>
    %cst_54 = arith.constant 3.200000e+01 : f32
    %81 = vector.broadcast %cst_54 : f32 to vector<8x1xf32>
    %82 = arith.divf %80, %81 : vector<8x1xf32>
    %83 = vector.broadcast %75 : vector<8x1xf32> to vector<8x32xf32>
    %84 = arith.subf %67, %83 : vector<8x32xf32>
    %cst_55 = arith.constant 9.99999996E-13 : f32
    %85 = vector.broadcast %cst_55 : f32 to vector<8x1xf32>
    %86 = arith.addf %82, %85 : vector<8x1xf32>
    %87 = math.rsqrt %86 : vector<8x1xf32>
    %88 = vector.broadcast %87 : vector<8x1xf32> to vector<8x32xf32>
    %89 = arith.mulf %84, %88 : vector<8x32xf32>
    %90 = vector.broadcast %69 : vector<1x32xf32> to vector<8x32xf32>
    %91 = arith.mulf %89, %90 : vector<8x32xf32>
    %92 = vector.broadcast %71 : vector<1x32xf32> to vector<8x32xf32>
    %93 = arith.addf %91, %92 : vector<8x32xf32>
    %94 = arith.truncf %93 : vector<8x32xf32> to vector<8x32xbf16>
    %c0_56 = arith.constant 0 : index
    %c0_57 = arith.constant 0 : index
    %c0_58 = arith.constant 0 : index
    %95 = vector.load %arg16[%c0_56, %c0_57, %c0_58] : memref<1x32x64xbf16, #tpu.memory_space<vmem>>, vector<1x32x64xbf16>
    %96 = vector.shape_cast %95 : vector<1x32x64xbf16> to vector<32x64xbf16>
    %cst_59 = arith.constant dense<0.000000e+00> : vector<8x64xf32>
    %97 = tpu.matmul %94, %96, %cst_59 {dimension_numbers = #tpu.dot_dimension_numbers<[1], [0], [0], [1], [0, 0, 1, 1], [], []>} : vector<8x32xbf16>, vector<32x64xbf16>, vector<8x64xf32> -> vector<8x64xf32>
    %c0_60 = arith.constant 0 : index
    %c0_61 = arith.constant 0 : index
    %c0_62 = arith.constant 0 : index
    %98 = vector.load %arg17[%c0_60, %c0_61, %c0_62] : memref<1x1x64xf32, #tpu.memory_space<vmem>>, vector<1x1x64xf32>
    %99 = vector.shape_cast %98 : vector<1x1x64xf32> to vector<1x64xf32>
    %100 = vector.broadcast %99 : vector<1x64xf32> to vector<8x64xf32>
    %101 = arith.addf %97, %100 : vector<8x64xf32>
    %102 = arith.mulf %101, %101 : vector<8x64xf32>
    %103 = arith.mulf %101, %102 : vector<8x64xf32>
    %cst_63 = arith.constant 4.471500e-02 : f32
    %104 = vector.broadcast %cst_63 : f32 to vector<8x64xf32>
    %105 = arith.mulf %104, %103 : vector<8x64xf32>
    %106 = arith.addf %101, %105 : vector<8x64xf32>
    %cst_64 = arith.constant 0.797884583 : f32
    %107 = vector.broadcast %cst_64 : f32 to vector<8x64xf32>
    %108 = arith.mulf %107, %106 : vector<8x64xf32>
    %109 = math.tanh %108 : vector<8x64xf32>
    %cst_65 = arith.constant 1.000000e+00 : f32
    %110 = vector.broadcast %cst_65 : f32 to vector<8x64xf32>
    %111 = arith.addf %110, %109 : vector<8x64xf32>
    %cst_66 = arith.constant 5.000000e-01 : f32
    %112 = vector.broadcast %cst_66 : f32 to vector<8x64xf32>
    %113 = arith.mulf %112, %111 : vector<8x64xf32>
    %114 = arith.mulf %101, %113 : vector<8x64xf32>
    %115 = arith.truncf %114 : vector<8x64xf32> to vector<8x64xbf16>
    %c0_67 = arith.constant 0 : index
    %c0_68 = arith.constant 0 : index
    %c0_69 = arith.constant 0 : index
    %116 = vector.load %arg18[%c0_67, %c0_68, %c0_69] : memref<1x64x32xbf16, #tpu.memory_space<vmem>>, vector<1x64x32xbf16>
    %117 = vector.shape_cast %116 : vector<1x64x32xbf16> to vector<64x32xbf16>
    %cst_70 = arith.constant dense<0.000000e+00> : vector<8x32xf32>
    %118 = tpu.matmul %115, %117, %cst_70 {dimension_numbers = #tpu.dot_dimension_numbers<[1], [0], [0], [1], [0, 0, 1, 1], [], []>} : vector<8x64xbf16>, vector<64x32xbf16>, vector<8x32xf32> -> vector<8x32xf32>
    %c0_71 = arith.constant 0 : index
    %c0_72 = arith.constant 0 : index
    %c0_73 = arith.constant 0 : index
    %119 = vector.load %arg19[%c0_71, %c0_72, %c0_73] : memref<1x1x32xf32, #tpu.memory_space<vmem>>, vector<1x1x32xf32>
    %120 = vector.shape_cast %119 : vector<1x1x32xf32> to vector<1x32xf32>
    %121 = vector.broadcast %120 : vector<1x32xf32> to vector<8x32xf32>
    %122 = arith.addf %118, %121 : vector<8x32xf32>
    %123 = arith.addf %93, %122 : vector<8x32xf32>
    %c0_74 = arith.constant 0 : index
    %c0_75 = arith.constant 0 : index
    %c0_76 = arith.constant 0 : index
    %124 = vector.load %arg20[%c0_74, %c0_75, %c0_76] : memref<1x1x32xf32, #tpu.memory_space<vmem>>, vector<1x1x32xf32>
    %125 = vector.shape_cast %124 : vector<1x1x32xf32> to vector<1x32xf32>
    %c0_77 = arith.constant 0 : index
    %c0_78 = arith.constant 0 : index
    %c0_79 = arith.constant 0 : index
    %126 = vector.load %arg21[%c0_77, %c0_78, %c0_79] : memref<1x1x32xf32, #tpu.memory_space<vmem>>, vector<1x1x32xf32>
    %127 = vector.shape_cast %126 : vector<1x1x32xf32> to vector<1x32xf32>
    %cst_80 = arith.constant dense<0.000000e+00> : vector<8xf32>
    %128 = vector.multi_reduction <add>, %123, %cst_80 [1] : vector<8x32xf32> to vector<8xf32>
    %129 = vector.shape_cast %128 : vector<8xf32> to vector<8x1xf32>
    %cst_81 = arith.constant 3.200000e+01 : f32
    %130 = vector.broadcast %cst_81 : f32 to vector<8x1xf32>
    %131 = arith.divf %129, %130 : vector<8x1xf32>
    %132 = vector.broadcast %131 : vector<8x1xf32> to vector<8x32xf32>
    %133 = arith.subf %123, %132 : vector<8x32xf32>
    %134 = arith.mulf %133, %133 : vector<8x32xf32>
    %cst_82 = arith.constant dense<0.000000e+00> : vector<8xf32>
    %135 = vector.multi_reduction <add>, %134, %cst_82 [1] : vector<8x32xf32> to vector<8xf32>
    %136 = vector.shape_cast %135 : vector<8xf32> to vector<8x1xf32>
    %cst_83 = arith.constant 3.200000e+01 : f32
    %137 = vector.broadcast %cst_83 : f32 to vector<8x1xf32>
    %138 = arith.divf %136, %137 : vector<8x1xf32>
    %139 = vector.broadcast %131 : vector<8x1xf32> to vector<8x32xf32>
    %140 = arith.subf %123, %139 : vector<8x32xf32>
    %cst_84 = arith.constant 9.99999996E-13 : f32
    %141 = vector.broadcast %cst_84 : f32 to vector<8x1xf32>
    %142 = arith.addf %138, %141 : vector<8x1xf32>
    %143 = math.rsqrt %142 : vector<8x1xf32>
    %144 = vector.broadcast %143 : vector<8x1xf32> to vector<8x32xf32>
    %145 = arith.mulf %140, %144 : vector<8x32xf32>
    %146 = vector.broadcast %125 : vector<1x32xf32> to vector<8x32xf32>
    %147 = arith.mulf %145, %146 : vector<8x32xf32>
    %148 = vector.broadcast %127 : vector<1x32xf32> to vector<8x32xf32>
    %149 = arith.addf %147, %148 : vector<8x32xf32>
    %c0_85 = arith.constant 0 : index
    %c0_86 = arith.constant 0 : index
    %150 = vector.load %arg27[%c0_85, %c0_86] : memref<8x32xf32, #tpu.memory_space<vmem>>, vector<8x32xf32>
    tpu.vector_store %arg27[%c0_85, %c0_86], %149 {strides = array<i32>} : memref<8x32xf32, #tpu.memory_space<vmem>>, vector<8x32xf32>,
    %c1_i32 = arith.constant 1 : i32
    %151 = arith.cmpi eq, %arg1, %c1_i32 : i32
    %152 = arith.extui %151 : i1 to i32
    %c0_i32_87 = arith.constant 0 : i32
    %153 = arith.cmpi ne, %152, %c0_i32_87 : i32
    scf.if %153 {
      %154 = vector.extract_strided_slice %149 {offsets = [0, 0], sizes = [1, 32], strides = [1, 1]} : vector<8x32xf32> to vector<1x32xf32>
      %155 = arith.truncf %154 : vector<1x32xf32> to vector<1x32xbf16>
      %c0_88 = arith.constant 0 : index
      %c0_89 = arith.constant 0 : index
      %156 = vector.load %arg22[%c0_88, %c0_89] : memref<32x32xbf16, #tpu.memory_space<vmem>>, vector<32x32xbf16>
      %cst_90 = arith.constant dense<0.000000e+00> : vector<1x32xf32>
      %157 = tpu.matmul %155, %156, %cst_90 {dimension_numbers = #tpu.dot_dimension_numbers<[1], [0], [0], [1], [0, 0, 1, 1], [], []>} : vector<1x32xbf16>, vector<32x32xbf16>, vector<1x32xf32> -> vector<1x32xf32>
      %c0_91 = arith.constant 0 : index
      %c0_92 = arith.constant 0 : index
      %158 = vector.load %arg23[%c0_91, %c0_92] : memref<1x32xf32, #tpu.memory_space<vmem>>, vector<1x32xf32>
      %159 = arith.addf %157, %158 : vector<1x32xf32>
      %160 = math.tanh %159 : vector<1x32xf32>
      %161 = arith.truncf %160 : vector<1x32xf32> to vector<1x32xbf16>
      %c0_93 = arith.constant 0 : index
      %c0_94 = arith.constant 0 : index
      %162 = vector.load %arg24[%c0_93, %c0_94] : memref<32x128xbf16, #tpu.memory_space<vmem>>, vector<32x128xbf16>
      %cst_95 = arith.constant dense<0.000000e+00> : vector<1x128xf32>
      %163 = tpu.matmul %161, %162, %cst_95 {dimension_numbers = #tpu.dot_dimension_numbers<[1], [0], [0], [1], [0, 0, 1, 1], [], []>} : vector<1x32xbf16>, vector<32x128xbf16>, vector<1x128xf32> -> vector<1x128xf32>
      %c0_96 = arith.constant 0 : index
      %c0_97 = arith.constant 0 : index
      %164 = vector.load %arg25[%c0_96, %c0_97] : memref<1x128xf32, #tpu.memory_space<vmem>>, vector<1x128xf32>
      %165 = arith.addf %163, %164 : vector<1x128xf32>
      %166 = vector.shape_cast %165 : vector<1x128xf32> to vector<1x128xf32>
      %167 = vector.broadcast %166 : vector<1x128xf32> to vector<8x128xf32>
      %c0_98 = arith.constant 0 : index
      %c0_99 = arith.constant 0 : index
      %c0_100 = arith.constant 0 : index
      %168 = vector.load %arg26[%c0_98, %c0_99, %c0_100] : memref<1x8x128xf32, #tpu.memory_space<vmem>>, vector<1x8x128xf32>
      %169 = vector.shape_cast %168 : vector<1x8x128xf32> to vector<8x128xf32>
      %170 = vector.shape_cast %167 : vector<8x128xf32> to vector<1x8x128xf32>
      tpu.vector_store %arg26[%c0_98, %c0_99, %c0_100], %170 {strides = array<i32>} : memref<1x8x128xf32, #tpu.memory_space<vmem>>, vector<1x8x128xf32>,
    } else {
    }
    return
  }
  func.func @transform_0(%arg0: i32, %arg1: i32, %arg2: memref<2xi32, #tpu.memory_space<smem>>) -> (i32, i32, i32) {
    %c0_i32 = arith.constant 0 : i32
    %c0_i32_0 = arith.constant 0 : i32
    %c0_i32_1 = arith.constant 0 : i32
    return %arg0, %c0_i32, %c0_i32_0 : i32, i32, i32
  }
  func.func @transform_1(%arg0: i32, %arg1: i32, %arg2: memref<2xi32, #tpu.memory_space<smem>>) -> (i32, i32) {
    %c0_i32 = arith.constant 0 : i32
    %c0_i32_0 = arith.constant 0 : i32
    %c0_i32_1 = arith.constant 0 : i32
    return %c0_i32, %c0_i32_0 : i32, i32
  }
  func.func @transform_2(%arg0: i32, %arg1: i32, %arg2: memref<2xi32, #tpu.memory_space<smem>>) -> (i32, i32) {
    %c0_i32 = arith.constant 0 : i32
    %c0_i32_0 = arith.constant 0 : i32
    %c0_i32_1 = arith.constant 0 : i32
    return %c0_i32, %c0_i32_0 : i32, i32
  }
  func.func @transform_3(%arg0: i32, %arg1: i32, %arg2: memref<2xi32, #tpu.memory_space<smem>>) -> (i32, i32, i32, i32) {
    %c0_i32 = arith.constant 0 : i32
    %c0_i32_0 = arith.constant 0 : i32
    %c0_i32_1 = arith.constant 0 : i32
    %c0_i32_2 = arith.constant 0 : i32
    return %arg1, %c0_i32, %c0_i32_0, %c0_i32_1 : i32, i32, i32, i32
  }
  func.func @transform_4(%arg0: i32, %arg1: i32, %arg2: memref<2xi32, #tpu.memory_space<smem>>) -> (i32, i32, i32, i32) {
    %c0_i32 = arith.constant 0 : i32
    %c0_i32_0 = arith.constant 0 : i32
    %c0_i32_1 = arith.constant 0 : i32
    %c0_i32_2 = arith.constant 0 : i32
    return %arg1, %c0_i32, %c0_i32_0, %c0_i32_1 : i32, i32, i32, i32
  }
  func.func @transform_5(%arg0: i32, %arg1: i32, %arg2: memref<2xi32, #tpu.memory_space<smem>>) -> (i32, i32, i32, i32) {
    %c0_i32 = arith.constant 0 : i32
    %c0_i32_0 = arith.constant 0 : i32
    %c0_i32_1 = arith.constant 0 : i32
    %c0_i32_2 = arith.constant 0 : i32
    return %arg1, %c0_i32, %c0_i32_0, %c0_i32_1 : i32, i32, i32, i32
  }
  func.func @transform_6(%arg0: i32, %arg1: i32, %arg2: memref<2xi32, #tpu.memory_space<smem>>) -> (i32, i32, i32, i32) {
    %c0_i32 = arith.constant 0 : i32
    %c0_i32_0 = arith.constant 0 : i32
    %c0_i32_1 = arith.constant 0 : i32
    %c0_i32_2 = arith.constant 0 : i32
    return %arg1, %c0_i32, %c0_i32_0, %c0_i32_1 : i32, i32, i32, i32
  }
  func.func @transform_7(%arg0: i32, %arg1: i32, %arg2: memref<2xi32, #tpu.memory_space<smem>>) -> (i32, i32, i32, i32) {
    %c0_i32 = arith.constant 0 : i32
    %c0_i32_0 = arith.constant 0 : i32
    %c0_i32_1 = arith.constant 0 : i32
    %c0_i32_2 = arith.constant 0 : i32
    return %arg1, %c0_i32, %c0_i32_0, %c0_i32_1 : i32, i32, i32, i32
  }
  func.func @transform_8(%arg0: i32, %arg1: i32, %arg2: memref<2xi32, #tpu.memory_space<smem>>) -> (i32, i32, i32, i32) {
    %c0_i32 = arith.constant 0 : i32
    %c0_i32_0 = arith.constant 0 : i32
    %c0_i32_1 = arith.constant 0 : i32
    %c0_i32_2 = arith.constant 0 : i32
    return %arg1, %c0_i32, %c0_i32_0, %c0_i32_1 : i32, i32, i32, i32
  }
  func.func @transform_9(%arg0: i32, %arg1: i32, %arg2: memref<2xi32, #tpu.memory_space<smem>>) -> (i32, i32, i32, i32) {
    %c0_i32 = arith.constant 0 : i32
    %c0_i32_0 = arith.constant 0 : i32
    %c0_i32_1 = arith.constant 0 : i32
    %c0_i32_2 = arith.constant 0 : i32
    return %arg1, %c0_i32, %c0_i32_0, %c0_i32_1 : i32, i32, i32, i32
  }
  func.func @transform_10(%arg0: i32, %arg1: i32, %arg2: memref<2xi32, #tpu.memory_space<smem>>) -> (i32, i32, i32) {
    %c0_i32 = arith.constant 0 : i32
    %c0_i32_0 = arith.constant 0 : i32
    %c0_i32_1 = arith.constant 0 : i32
    return %arg1, %c0_i32, %c0_i32_0 : i32, i32, i32
  }
  func.func @transform_11(%arg0: i32, %arg1: i32, %arg2: memref<2xi32, #tpu.memory_space<smem>>) -> (i32, i32, i32) {
    %c0_i32 = arith.constant 0 : i32
    %c0_i32_0 = arith.constant 0 : i32
    %c0_i32_1 = arith.constant 0 : i32
    return %arg1, %c0_i32, %c0_i32_0 : i32, i32, i32
  }
  func.func @transform_12(%arg0: i32, %arg1: i32, %arg2: memref<2xi32, #tpu.memory_space<smem>>) -> (i32, i32, i32) {
    %c0_i32 = arith.constant 0 : i32
    %c0_i32_0 = arith.constant 0 : i32
    %c0_i32_1 = arith.constant 0 : i32
    return %arg1, %c0_i32, %c0_i32_0 : i32, i32, i32
  }
  func.func @transform_13(%arg0: i32, %arg1: i32, %arg2: memref<2xi32, #tpu.memory_space<smem>>) -> (i32, i32, i32) {
    %c0_i32 = arith.constant 0 : i32
    %c0_i32_0 = arith.constant 0 : i32
    %c0_i32_1 = arith.constant 0 : i32
    return %arg1, %c0_i32, %c0_i32_0 : i32, i32, i32
  }
  func.func @transform_14(%arg0: i32, %arg1: i32, %arg2: memref<2xi32, #tpu.memory_space<smem>>) -> (i32, i32, i32) {
    %c0_i32 = arith.constant 0 : i32
    %c0_i32_0 = arith.constant 0 : i32
    %c0_i32_1 = arith.constant 0 : i32
    return %arg1, %c0_i32, %c0_i32_0 : i32, i32, i32
  }
  func.func @transform_15(%arg0: i32, %arg1: i32, %arg2: memref<2xi32, #tpu.memory_space<smem>>) -> (i32, i32, i32) {
    %c0_i32 = arith.constant 0 : i32
    %c0_i32_0 = arith.constant 0 : i32
    %c0_i32_1 = arith.constant 0 : i32
    return %arg1, %c0_i32, %c0_i32_0 : i32, i32, i32
  }
  func.func @transform_16(%arg0: i32, %arg1: i32, %arg2: memref<2xi32, #tpu.memory_space<smem>>) -> (i32, i32, i32) {
    %c0_i32 = arith.constant 0 : i32
    %c0_i32_0 = arith.constant 0 : i32
    %c0_i32_1 = arith.constant 0 : i32
    return %arg1, %c0_i32, %c0_i32_0 : i32, i32, i32
  }
  func.func @transform_17(%arg0: i32, %arg1: i32, %arg2: memref<2xi32, #tpu.memory_space<smem>>) -> (i32, i32, i32) {
    %c0_i32 = arith.constant 0 : i32
    %c0_i32_0 = arith.constant 0 : i32
    %c0_i32_1 = arith.constant 0 : i32
    return %arg1, %c0_i32, %c0_i32_0 : i32, i32, i32
  }
  func.func @transform_18(%arg0: i32, %arg1: i32, %arg2: memref<2xi32, #tpu.memory_space<smem>>) -> (i32, i32, i32) {
    %c0_i32 = arith.constant 0 : i32
    %c0_i32_0 = arith.constant 0 : i32
    %c0_i32_1 = arith.constant 0 : i32
    return %arg1, %c0_i32, %c0_i32_0 : i32, i32, i32
  }
  func.func @transform_19(%arg0: i32, %arg1: i32, %arg2: memref<2xi32, #tpu.memory_space<smem>>) -> (i32, i32) {
    %c0_i32 = arith.constant 0 : i32
    %c0_i32_0 = arith.constant 0 : i32
    %c0_i32_1 = arith.constant 0 : i32
    return %c0_i32, %c0_i32_0 : i32, i32
  }
  func.func @transform_20(%arg0: i32, %arg1: i32, %arg2: memref<2xi32, #tpu.memory_space<smem>>) -> (i32, i32) {
    %c0_i32 = arith.constant 0 : i32
    %c0_i32_0 = arith.constant 0 : i32
    %c0_i32_1 = arith.constant 0 : i32
    return %c0_i32, %c0_i32_0 : i32, i32
  }
  func.func @transform_21(%arg0: i32, %arg1: i32, %arg2: memref<2xi32, #tpu.memory_space<smem>>) -> (i32, i32) {
    %c0_i32 = arith.constant 0 : i32
    %c0_i32_0 = arith.constant 0 : i32
    %c0_i32_1 = arith.constant 0 : i32
    return %c0_i32, %c0_i32_0 : i32, i32
  }
  func.func @transform_22(%arg0: i32, %arg1: i32, %arg2: memref<2xi32, #tpu.memory_space<smem>>) -> (i32, i32) {
    %c0_i32 = arith.constant 0 : i32
    %c0_i32_0 = arith.constant 0 : i32
    %c0_i32_1 = arith.constant 0 : i32
    return %c0_i32, %c0_i32_0 : i32, i32
  }
  func.func @transform_23(%arg0: i32, %arg1: i32, %arg2: memref<2xi32, #tpu.memory_space<smem>>) -> (i32, i32, i32) {
    %c0_i32 = arith.constant 0 : i32
    %c0_i32_0 = arith.constant 0 : i32
    %c0_i32_1 = arith.constant 0 : i32
    return %arg0, %c0_i32, %c0_i32_0 : i32, i32, i32
  }
}

</mosaic_0001>

<llo_original>
// kernel: bert_classifier_forward.1
$region0: #{bert_classifier_forward.1}
  #allocation0 [shape = 'u32[]', space=smem, size = 0x4, offset = 0x4, fixed_abs, tag = 'smem constant byte address 0x4 - core index']
  #allocation1 [shape = 'u32[144,128]{1,0:T(1,128)}', space=vmem, size = 0x12000, scoped, tag = 'internal scratch']
  #allocation2 [shape = 'f32[8,32]{1,0:T(8,128)}', space=vmem, size = 0x1000, scoped, tag = 'scratch operand']
  #allocation3 [shape = 's32[1]{0}', space=sflag, size = 0x4, scoped, tag = 'scoped memory for bert_classifier_forward.1']
  #allocation4 [shape = 'u8[512]{0}', space=smem, size = 0x200, scoped, tag = 'prefetched SMEM operand 0']
  %s0 = inlined_call_operand.vmem [shape: s32[2], index: 0, kind: input, shape index: {}]
  %s1 = inlined_call_operand.vmem [shape: f32[2,8,32], index: 1, kind: input, shape index: {}]
  %s2 = inlined_call_operand.vmem [shape: f32[1,32], index: 2, kind: input, shape index: {}]
  %s3 = inlined_call_operand.vmem [shape: f32[1,32], index: 3, kind: input, shape index: {}, may-alias: {3,21}]
  %s4 = inlined_call_operand.vmem [shape: bf16[2,2,32,16], index: 4, kind: input, shape index: {}]
  %s5 = inlined_call_operand.vmem [shape: f32[2,2,1,16], index: 5, kind: input, shape index: {}, may-alias: {5,7,9}]
  %s6 = inlined_call_operand.vmem [shape: bf16[2,2,32,16], index: 6, kind: input, shape index: {}]
  %s7 = inlined_call_operand.vmem [shape: f32[2,2,1,16], index: 7, kind: input, shape index: {}, may-alias: {5,7,9}]
  %s8 = inlined_call_operand.vmem [shape: bf16[2,2,32,16], index: 8, kind: input, shape index: {}]
  %s9 = inlined_call_operand.vmem [shape: f32[2,2,1,16], index: 9, kind: input, shape index: {}, may-alias: {5,7,9}]
  %s10 = inlined_call_operand.vmem [shape: bf16[2,2,16,32], index: 10, kind: input, shape index: {}]
  %s11 = inlined_call_operand.vmem [shape: f32[2,1,32], index: 11, kind: input, shape index: {}, may-alias: {11,13,17,19}]
  %s12 = inlined_call_operand.vmem [shape: f32[2,1,32], index: 12, kind: input, shape index: {}, may-alias: {12,18}]
  %s13 = inlined_call_operand.vmem [shape: f32[2,1,32], index: 13, kind: input, shape index: {}, may-alias: {11,13,17,19}]
  %s14 = inlined_call_operand.vmem [shape: bf16[2,32,64], index: 14, kind: input, shape index: {}]
  %s15 = inlined_call_operand.vmem [shape: f32[2,1,64], index: 15, kind: input, shape index: {}]
  %s16 = inlined_call_operand.vmem [shape: bf16[2,64,32], index: 16, kind: input, shape index: {}]
  %s17 = inlined_call_operand.vmem [shape: f32[2,1,32], index: 17, kind: input, shape index: {}, may-alias: {11,13,17,19}]
  %s18 = inlined_call_operand.vmem [shape: f32[2,1,32], index: 18, kind: input, shape index: {}, may-alias: {12,18}]
  %s19 = inlined_call_operand.vmem [shape: f32[2,1,32], index: 19, kind: input, shape index: {}, may-alias: {11,13,17,19}]
  %s20 = inlined_call_operand.vmem [shape: bf16[32,32], index: 20, kind: input, shape index: {}]
  %s21 = inlined_call_operand.vmem [shape: f32[1,32], index: 21, kind: input, shape index: {}, may-alias: {3,21}]
  %s22 = inlined_call_operand.vmem [shape: bf16[32,128], index: 22, kind: input, shape index: {}]
  %s23 = inlined_call_operand.vmem [shape: f32[1,128], index: 23, kind: input, shape index: {}]
  %s24 = inlined_call_operand.vmem [shape: f32[2,8,128], index: 24, kind: output, shape index: {}]
  %s25 = sld [smem:[#allocation0]]
  $region133: #{bert_classifier_forward.1} parent=0
    _
  %s27 = ssub.s32 1, %s25
  %s28 = scalar_select 0, %s27, %s25
  %s29 = sshll.u32 %s0, 4
  %s30 = int_to_ptr.vmem [resolvable:$true] %s29
  %32 = dma.vmem_to_smem %s30, 16, [#allocation4], [#allocation3]
  %33 = dma.done [#allocation3], 16
  %34 = sfence
  loop: start=0, step=1, limit=6
  $region2: #{bert_classifier_forward.1} parent=0 // loop_pre_header
    _
  $region3: #{bert_classifier_forward.1} parent=0 // loop_header
    %s36 = sphi 0, %s40
    %p37 = scmp.ge.s32.totalorder %s36, 6
    %s43 = sphi 0, %s55
    %s44 = sphi 0, %s51
    %s45 = sphi 0, %s43
    %s46 = sphi 0, %s44
    %s47 = sphi 0, %s45
    %s48 = sphi 0, %s46
    %s58 = sphi 0, %s60
    %s61 = sphi 0, %s58
    %s62 = sphi 0, %s61
    %s78 = sphi 0, %s62
    %s82 = sphi 0, %s82
    %s84 = sphi 0, %s82
    %s85 = sphi 0, %s84
    %s99 = sphi 0, %s85
    %s103 = sphi 0, %s103
    %s105 = sphi 0, %s103
    %s106 = sphi 0, %s105
    %s120 = sphi 0, %s106
    %s126 = sphi 0, %s128
    %s129 = sphi 0, %s126
    %s130 = sphi 0, %s129
    %s146 = sphi 0, %s130
    %s152 = sphi 0, %s154
    %s155 = sphi 0, %s152
    %s156 = sphi 0, %s155
    %s172 = sphi 0, %s156
    %s178 = sphi 0, %s180
    %s181 = sphi 0, %s178
    %s182 = sphi 0, %s181
    %s198 = sphi 0, %s182
    %s204 = sphi 0, %s206
    %s207 = sphi 0, %s204
    %s208 = sphi 0, %s207
    %s224 = sphi 0, %s208
    %s230 = sphi 0, %s232
    %s233 = sphi 0, %s230
    %s234 = sphi 0, %s233
    %s250 = sphi 0, %s234
    %s256 = sphi 0, %s258
    %s259 = sphi 0, %s256
    %s260 = sphi 0, %s259
    %s276 = sphi 0, %s260
    %s282 = sphi 0, %s284
    %s285 = sphi 0, %s282
    %s286 = sphi 0, %s285
    %s302 = sphi 0, %s286
    %s308 = sphi 0, %s310
    %s311 = sphi 0, %s308
    %s312 = sphi 0, %s311
    %s328 = sphi 0, %s312
    %s334 = sphi 0, %s336
    %s337 = sphi 0, %s334
    %s338 = sphi 0, %s337
    %s354 = sphi 0, %s338
    %s360 = sphi 0, %s362
    %s363 = sphi 0, %s360
    %s364 = sphi 0, %s363
    %s380 = sphi 0, %s364
    %s386 = sphi 0, %s388
    %s389 = sphi 0, %s386
    %s390 = sphi 0, %s389
    %s406 = sphi 0, %s390
    %s412 = sphi 0, %s414
    %s415 = sphi 0, %s412
    %s416 = sphi 0, %s415
    %s432 = sphi 0, %s416
    %s438 = sphi 0, %s440
    %s441 = sphi 0, %s438
    %s442 = sphi 0, %s441
    %s458 = sphi 0, %s442
    %s464 = sphi 0, %s466
    %s467 = sphi 0, %s464
    %s468 = sphi 0, %s467
    %s484 = sphi 0, %s468
    %s490 = sphi 0, %s492
    %s493 = sphi 0, %s490
    %s494 = sphi 0, %s493
    %s510 = sphi 0, %s494
    %s516 = sphi 0, %s518
    %s519 = sphi 0, %s516
    %s520 = sphi 0, %s519
    %s536 = sphi 0, %s520
    %s540 = sphi 0, %s540
    %s542 = sphi 0, %s540
    %s543 = sphi 0, %s542
    %s557 = sphi 0, %s543
    %s561 = sphi 0, %s561
    %s563 = sphi 0, %s561
    %s564 = sphi 0, %s563
    %s578 = sphi 0, %s564
    %s582 = sphi 0, %s582
    %s584 = sphi 0, %s582
    %s585 = sphi 0, %s584
    %s599 = sphi 0, %s585
    %s603 = sphi 0, %s603
    %s605 = sphi 0, %s603
    %s606 = sphi 0, %s605
    %s620 = sphi 0, %s606
    %s626 = sphi 0, %s628
    %s629 = sphi 0, %s626
    %s630 = sphi 0, %s629
    %s646 = sphi 0, %s630
  $region4: #{bert_classifier_forward.1} parent=0 // loop_header_branch
    %39 = sbr.rel (%p37) target = $region8
  $region5: #{bert_classifier_forward.1} parent=0 // loop_body
    %s41 = ssub.s32 %s36, 1
    %s42 = ssub.s32 %s36, 2
    %s49 = sadd.s32 1, %s44
    %p50 = scmp.ge.s32.totalorder %s49, 2
    %s51 = scalar_select %p50, 0, %s49
    %s52 = sadd.s32 1, %s43
    %s53 = scalar_select %p50, %s52, %s43
    %p54 = scmp.ge.s32.totalorder %s53, 2
    %s55 = scalar_select %p54, 0, %s53
    %s56 = ssub.s32 %s43, %s55
    %p57 = scmp.eq.s32.totalorder %s56, 0
    %s59 = sadd.s32 %s58, 1
    %s60 = scalar_select %p57, %s58, %s59
    %p63 = pneg %p57
    %p64 = scmp.eq.s32.totalorder %s36, 3
    %p65 = por %p63, %p64
    %p66 = scmp.ne.s32.totalorder %s58, %s61
    %p67 = scmp.eq.s32.totalorder %s36, 0
    %p68 = por %p66, %p67
    %p69 = scmp.ne.s32.totalorder %s58, %s61
    %p70 = scmp.eq.s32.totalorder %s41, 3
    %p71 = por %p69, %p70
    %p72 = scmp.ne.s32.totalorder %s61, %s62
    %p73 = scmp.eq.s32.totalorder %s41, 0
    %p74 = por %p72, %p73
    %p75 = scmp.ne.s32.totalorder %s61, %s62
    %p76 = scmp.eq.s32.totalorder %s42, 3
    %p77 = por %p75, %p76
    %p79 = scmp.ne.s32.totalorder %s62, %s78
    %p80 = scmp.eq.s32.totalorder %s42, 0
    %p81 = por %p79, %p80
    %s83 = sadd.s32 %s82, 1
    %p86 = scmp.eq.s32.totalorder %s36, 3
    %p87 = scmp.ne.s32.totalorder %s82, %s84
    %p88 = scmp.eq.s32.totalorder %s36, 0
    %p89 = por %p87, %p88
    %p90 = scmp.ne.s32.totalorder %s82, %s84
    %p91 = scmp.eq.s32.totalorder %s41, 3
    %p92 = por %p90, %p91
    %p93 = scmp.ne.s32.totalorder %s84, %s85
    %p94 = scmp.eq.s32.totalorder %s41, 0
    %p95 = por %p93, %p94
    %p96 = scmp.ne.s32.totalorder %s84, %s85
    %p97 = scmp.eq.s32.totalorder %s42, 3
    %p98 = por %p96, %p97
    %p100 = scmp.ne.s32.totalorder %s85, %s99
    %p101 = scmp.eq.s32.totalorder %s42, 0
    %p102 = por %p100, %p101
    %s104 = sadd.s32 %s103, 1
    %p107 = scmp.eq.s32.totalorder %s36, 3
    %p108 = scmp.ne.s32.totalorder %s103, %s105
    %p109 = scmp.eq.s32.totalorder %s36, 0
    %p110 = por %p108, %p109
    %p111 = scmp.ne.s32.totalorder %s103, %s105
    %p112 = scmp.eq.s32.totalorder %s41, 3
    %p113 = por %p111, %p112
    %p114 = scmp.ne.s32.totalorder %s105, %s106
    %p115 = scmp.eq.s32.totalorder %s41, 0
    %p116 = por %p114, %p115
    %p117 = scmp.ne.s32.totalorder %s105, %s106
    %p118 = scmp.eq.s32.totalorder %s42, 3
    %p119 = por %p117, %p118
    %p121 = scmp.ne.s32.totalorder %s106, %s120
    %p122 = scmp.eq.s32.totalorder %s42, 0
    %p123 = por %p121, %p122
    %s124 = ssub.s32 %s44, %s51
    %p125 = scmp.eq.s32.totalorder %s124, 0
    %s127 = sadd.s32 %s126, 1
    %s128 = scalar_select %p125, %s126, %s127
    %p131 = pneg %p125
    %p132 = scmp.eq.s32.totalorder %s36, 3
    %p133 = por %p131, %p132
    %p134 = scmp.ne.s32.totalorder %s126, %s129
    %p135 = scmp.eq.s32.totalorder %s36, 0
    %p136 = por %p134, %p135
    %p137 = scmp.ne.s32.totalorder %s126, %s129
    %p138 = scmp.eq.s32.totalorder %s41, 3
    %p139 = por %p137, %p138
    %p140 = scmp.ne.s32.totalorder %s129, %s130
    %p141 = scmp.eq.s32.totalorder %s41, 0
    %p142 = por %p140, %p141
    %p143 = scmp.ne.s32.totalorder %s129, %s130
    %p144 = scmp.eq.s32.totalorder %s42, 3
    %p145 = por %p143, %p144
    %p147 = scmp.ne.s32.totalorder %s130, %s146
    %p148 = scmp.eq.s32.totalorder %s42, 0
    %p149 = por %p147, %p148
    %s150 = ssub.s32 %s44, %s51
    %p151 = scmp.eq.s32.totalorder %s150, 0
    %s153 = sadd.s32 %s152, 1
    %s154 = scalar_select %p151, %s152, %s153
    %p157 = pneg %p151
    %p158 = scmp.eq.s32.totalorder %s36, 3
    %p159 = por %p157, %p158
    %p160 = scmp.ne.s32.totalorder %s152, %s155
    %p161 = scmp.eq.s32.totalorder %s36, 0
    %p162 = por %p160, %p161
    %p163 = scmp.ne.s32.totalorder %s152, %s155
    %p164 = scmp.eq.s32.totalorder %s41, 3
    %p165 = por %p163, %p164
    %p166 = scmp.ne.s32.totalorder %s155, %s156
    %p167 = scmp.eq.s32.totalorder %s41, 0
    %p168 = por %p166, %p167
    %p169 = scmp.ne.s32.totalorder %s155, %s156
    %p170 = scmp.eq.s32.totalorder %s42, 3
    %p171 = por %p169, %p170
    %p173 = scmp.ne.s32.totalorder %s156, %s172
    %p174 = scmp.eq.s32.totalorder %s42, 0
    %p175 = por %p173, %p174
    %s176 = ssub.s32 %s44, %s51
    %p177 = scmp.eq.s32.totalorder %s176, 0
    %s179 = sadd.s32 %s178, 1
    %s180 = scalar_select %p177, %s178, %s179
    %p183 = pneg %p177
    %p184 = scmp.eq.s32.totalorder %s36, 3
    %p185 = por %p183, %p184
    %p186 = scmp.ne.s32.totalorder %s178, %s181
    %p187 = scmp.eq.s32.totalorder %s36, 0
    %p188 = por %p186, %p187
    %p189 = scmp.ne.s32.totalorder %s178, %s181
    %p190 = scmp.eq.s32.totalorder %s41, 3
    %p191 = por %p189, %p190
    %p192 = scmp.ne.s32.totalorder %s181, %s182
    %p193 = scmp.eq.s32.totalorder %s41, 0
    %p194 = por %p192, %p193
    %p195 = scmp.ne.s32.totalorder %s181, %s182
    %p196 = scmp.eq.s32.totalorder %s42, 3
    %p197 = por %p195, %p196
    %p199 = scmp.ne.s32.totalorder %s182, %s198
    %p200 = scmp.eq.s32.totalorder %s42, 0
    %p201 = por %p199, %p200
    %s202 = ssub.s32 %s44, %s51
    %p203 = scmp.eq.s32.totalorder %s202, 0
    %s205 = sadd.s32 %s204, 1
    %s206 = scalar_select %p203, %s204, %s205
    %p209 = pneg %p203
    %p210 = scmp.eq.s32.totalorder %s36, 3
    %p211 = por %p209, %p210
    %p212 = scmp.ne.s32.totalorder %s204, %s207
    %p213 = scmp.eq.s32.totalorder %s36, 0
    %p214 = por %p212, %p213
    %p215 = scmp.ne.s32.totalorder %s204, %s207
    %p216 = scmp.eq.s32.totalorder %s41, 3
    %p217 = por %p215, %p216
    %p218 = scmp.ne.s32.totalorder %s207, %s208
    %p219 = scmp.eq.s32.totalorder %s41, 0
    %p220 = por %p218, %p219
    %p221 = scmp.ne.s32.totalorder %s207, %s208
    %p222 = scmp.eq.s32.totalorder %s42, 3
    %p223 = por %p221, %p222
    %p225 = scmp.ne.s32.totalorder %s208, %s224
    %p226 = scmp.eq.s32.totalorder %s42, 0
    %p227 = por %p225, %p226
    %s228 = ssub.s32 %s44, %s51
    %p229 = scmp.eq.s32.totalorder %s228, 0
    %s231 = sadd.s32 %s230, 1
    %s232 = scalar_select %p229, %s230, %s231
    %p235 = pneg %p229
    %p236 = scmp.eq.s32.totalorder %s36, 3
    %p237 = por %p235, %p236
    %p238 = scmp.ne.s32.totalorder %s230, %s233
    %p239 = scmp.eq.s32.totalorder %s36, 0
    %p240 = por %p238, %p239
    %p241 = scmp.ne.s32.totalorder %s230, %s233
    %p242 = scmp.eq.s32.totalorder %s41, 3
    %p243 = por %p241, %p242
    %p244 = scmp.ne.s32.totalorder %s233, %s234
    %p245 = scmp.eq.s32.totalorder %s41, 0
    %p246 = por %p244, %p245
    %p247 = scmp.ne.s32.totalorder %s233, %s234
    %p248 = scmp.eq.s32.totalorder %s42, 3
    %p249 = por %p247, %p248
    %p251 = scmp.ne.s32.totalorder %s234, %s250
    %p252 = scmp.eq.s32.totalorder %s42, 0
    %p253 = por %p251, %p252
    %s254 = ssub.s32 %s44, %s51
    %p255 = scmp.eq.s32.totalorder %s254, 0
    %s257 = sadd.s32 %s256, 1
    %s258 = scalar_select %p255, %s256, %s257
    %p261 = pneg %p255
    %p262 = scmp.eq.s32.totalorder %s36, 3
    %p263 = por %p261, %p262
    %p264 = scmp.ne.s32.totalorder %s256, %s259
    %p265 = scmp.eq.s32.totalorder %s36, 0
    %p266 = por %p264, %p265
    %p267 = scmp.ne.s32.totalorder %s256, %s259
    %p268 = scmp.eq.s32.totalorder %s41, 3
    %p269 = por %p267, %p268
    %p270 = scmp.ne.s32.totalorder %s259, %s260
    %p271 = scmp.eq.s32.totalorder %s41, 0
    %p272 = por %p270, %p271
    %p273 = scmp.ne.s32.totalorder %s259, %s260
    %p274 = scmp.eq.s32.totalorder %s42, 3
    %p275 = por %p273, %p274
    %p277 = scmp.ne.s32.totalorder %s260, %s276
    %p278 = scmp.eq.s32.totalorder %s42, 0
    %p279 = por %p277, %p278
    %s280 = ssub.s32 %s44, %s51
    %p281 = scmp.eq.s32.totalorder %s280, 0
    %s283 = sadd.s32 %s282, 1
    %s284 = scalar_select %p281, %s282, %s283
    %p287 = pneg %p281
    %p288 = scmp.eq.s32.totalorder %s36, 3
    %p289 = por %p287, %p288
    %p290 = scmp.ne.s32.totalorder %s282, %s285
    %p291 = scmp.eq.s32.totalorder %s36, 0
    %p292 = por %p290, %p291
    %p293 = scmp.ne.s32.totalorder %s282, %s285
    %p294 = scmp.eq.s32.totalorder %s41, 3
    %p295 = por %p293, %p294
    %p296 = scmp.ne.s32.totalorder %s285, %s286
    %p297 = scmp.eq.s32.totalorder %s41, 0
    %p298 = por %p296, %p297
    %p299 = scmp.ne.s32.totalorder %s285, %s286
    %p300 = scmp.eq.s32.totalorder %s42, 3
    %p301 = por %p299, %p300
    %p303 = scmp.ne.s32.totalorder %s286, %s302
    %p304 = scmp.eq.s32.totalorder %s42, 0
    %p305 = por %p303, %p304
    %s306 = ssub.s32 %s44, %s51
    %p307 = scmp.eq.s32.totalorder %s306, 0
    %s309 = sadd.s32 %s308, 1
    %s310 = scalar_select %p307, %s308, %s309
    %p313 = pneg %p307
    %p314 = scmp.eq.s32.totalorder %s36, 3
    %p315 = por %p313, %p314
    %p316 = scmp.ne.s32.totalorder %s308, %s311
    %p317 = scmp.eq.s32.totalorder %s36, 0
    %p318 = por %p316, %p317
    %p319 = scmp.ne.s32.totalorder %s308, %s311
    %p320 = scmp.eq.s32.totalorder %s41, 3
    %p321 = por %p319, %p320
    %p322 = scmp.ne.s32.totalorder %s311, %s312
    %p323 = scmp.eq.s32.totalorder %s41, 0
    %p324 = por %p322, %p323
    %p325 = scmp.ne.s32.totalorder %s311, %s312
    %p326 = scmp.eq.s32.totalorder %s42, 3
    %p327 = por %p325, %p326
    %p329 = scmp.ne.s32.totalorder %s312, %s328
    %p330 = scmp.eq.s32.totalorder %s42, 0
    %p331 = por %p329, %p330
    %s332 = ssub.s32 %s44, %s51
    %p333 = scmp.eq.s32.totalorder %s332, 0
    %s335 = sadd.s32 %s334, 1
    %s336 = scalar_select %p333, %s334, %s335
    %p339 = pneg %p333
    %p340 = scmp.eq.s32.totalorder %s36, 3
    %p341 = por %p339, %p340
    %p342 = scmp.ne.s32.totalorder %s334, %s337
    %p343 = scmp.eq.s32.totalorder %s36, 0
    %p344 = por %p342, %p343
    %p345 = scmp.ne.s32.totalorder %s334, %s337
    %p346 = scmp.eq.s32.totalorder %s41, 3
    %p347 = por %p345, %p346
    %p348 = scmp.ne.s32.totalorder %s337, %s338
    %p349 = scmp.eq.s32.totalorder %s41, 0
    %p350 = por %p348, %p349
    %p351 = scmp.ne.s32.totalorder %s337, %s338
    %p352 = scmp.eq.s32.totalorder %s42, 3
    %p353 = por %p351, %p352
    %p355 = scmp.ne.s32.totalorder %s338, %s354
    %p356 = scmp.eq.s32.totalorder %s42, 0
    %p357 = por %p355, %p356
    %s358 = ssub.s32 %s44, %s51
    %p359 = scmp.eq.s32.totalorder %s358, 0
    %s361 = sadd.s32 %s360, 1
    %s362 = scalar_select %p359, %s360, %s361
    %p365 = pneg %p359
    %p366 = scmp.eq.s32.totalorder %s36, 3
    %p367 = por %p365, %p366
    %p368 = scmp.ne.s32.totalorder %s360, %s363
    %p369 = scmp.eq.s32.totalorder %s36, 0
    %p370 = por %p368, %p369
    %p371 = scmp.ne.s32.totalorder %s360, %s363
    %p372 = scmp.eq.s32.totalorder %s41, 3
    %p373 = por %p371, %p372
    %p374 = scmp.ne.s32.totalorder %s363, %s364
    %p375 = scmp.eq.s32.totalorder %s41, 0
    %p376 = por %p374, %p375
    %p377 = scmp.ne.s32.totalorder %s363, %s364
    %p378 = scmp.eq.s32.totalorder %s42, 3
    %p379 = por %p377, %p378
    %p381 = scmp.ne.s32.totalorder %s364, %s380
    %p382 = scmp.eq.s32.totalorder %s42, 0
    %p383 = por %p381, %p382
    %s384 = ssub.s32 %s44, %s51
    %p385 = scmp.eq.s32.totalorder %s384, 0
    %s387 = sadd.s32 %s386, 1
    %s388 = scalar_select %p385, %s386, %s387
    %p391 = pneg %p385
    %p392 = scmp.eq.s32.totalorder %s36, 3
    %p393 = por %p391, %p392
    %p394 = scmp.ne.s32.totalorder %s386, %s389
    %p395 = scmp.eq.s32.totalorder %s36, 0
    %p396 = por %p394, %p395
    %p397 = scmp.ne.s32.totalorder %s386, %s389
    %p398 = scmp.eq.s32.totalorder %s41, 3
    %p399 = por %p397, %p398
    %p400 = scmp.ne.s32.totalorder %s389, %s390
    %p401 = scmp.eq.s32.totalorder %s41, 0
    %p402 = por %p400, %p401
    %p403 = scmp.ne.s32.totalorder %s389, %s390
    %p404 = scmp.eq.s32.totalorder %s42, 3
    %p405 = por %p403, %p404
    %p407 = scmp.ne.s32.totalorder %s390, %s406
    %p408 = scmp.eq.s32.totalorder %s42, 0
    %p409 = por %p407, %p408
    %s410 = ssub.s32 %s44, %s51
    %p411 = scmp.eq.s32.totalorder %s410, 0
    %s413 = sadd.s32 %s412, 1
    %s414 = scalar_select %p411, %s412, %s413
    %p417 = pneg %p411
    %p418 = scmp.eq.s32.totalorder %s36, 3
    %p419 = por %p417, %p418
    %p420 = scmp.ne.s32.totalorder %s412, %s415
    %p421 = scmp.eq.s32.totalorder %s36, 0
    %p422 = por %p420, %p421
    %p423 = scmp.ne.s32.totalorder %s412, %s415
    %p424 = scmp.eq.s32.totalorder %s41, 3
    %p425 = por %p423, %p424
    %p426 = scmp.ne.s32.totalorder %s415, %s416
    %p427 = scmp.eq.s32.totalorder %s41, 0
    %p428 = por %p426, %p427
    %p429 = scmp.ne.s32.totalorder %s415, %s416
    %p430 = scmp.eq.s32.totalorder %s42, 3
    %p431 = por %p429, %p430
    %p433 = scmp.ne.s32.totalorder %s416, %s432
    %p434 = scmp.eq.s32.totalorder %s42, 0
    %p435 = por %p433, %p434
    %s436 = ssub.s32 %s44, %s51
    %p437 = scmp.eq.s32.totalorder %s436, 0
    %s439 = sadd.s32 %s438, 1
    %s440 = scalar_select %p437, %s438, %s439
    %p443 = pneg %p437
    %p444 = scmp.eq.s32.totalorder %s36, 3
    %p445 = por %p443, %p444
    %p446 = scmp.ne.s32.totalorder %s438, %s441
    %p447 = scmp.eq.s32.totalorder %s36, 0
    %p448 = por %p446, %p447
    %p449 = scmp.ne.s32.totalorder %s438, %s441
    %p450 = scmp.eq.s32.totalorder %s41, 3
    %p451 = por %p449, %p450
    %p452 = scmp.ne.s32.totalorder %s441, %s442
    %p453 = scmp.eq.s32.totalorder %s41, 0
    %p454 = por %p452, %p453
    %p455 = scmp.ne.s32.totalorder %s441, %s442
    %p456 = scmp.eq.s32.totalorder %s42, 3
    %p457 = por %p455, %p456
    %p459 = scmp.ne.s32.totalorder %s442, %s458
    %p460 = scmp.eq.s32.totalorder %s42, 0
    %p461 = por %p459, %p460
    %s462 = ssub.s32 %s44, %s51
    %p463 = scmp.eq.s32.totalorder %s462, 0
    %s465 = sadd.s32 %s464, 1
    %s466 = scalar_select %p463, %s464, %s465
    %p469 = pneg %p463
    %p470 = scmp.eq.s32.totalorder %s36, 3
    %p471 = por %p469, %p470
    %p472 = scmp.ne.s32.totalorder %s464, %s467
    %p473 = scmp.eq.s32.totalorder %s36, 0
    %p474 = por %p472, %p473
    %p475 = scmp.ne.s32.totalorder %s464, %s467
    %p476 = scmp.eq.s32.totalorder %s41, 3
    %p477 = por %p475, %p476
    %p478 = scmp.ne.s32.totalorder %s467, %s468
    %p479 = scmp.eq.s32.totalorder %s41, 0
    %p480 = por %p478, %p479
    %p481 = scmp.ne.s32.totalorder %s467, %s468
    %p482 = scmp.eq.s32.totalorder %s42, 3
    %p483 = por %p481, %p482
    %p485 = scmp.ne.s32.totalorder %s468, %s484
    %p486 = scmp.eq.s32.totalorder %s42, 0
    %p487 = por %p485, %p486
    %s488 = ssub.s32 %s44, %s51
    %p489 = scmp.eq.s32.totalorder %s488, 0
    %s491 = sadd.s32 %s490, 1
    %s492 = scalar_select %p489, %s490, %s491
    %p495 = pneg %p489
    %p496 = scmp.eq.s32.totalorder %s36, 3
    %p497 = por %p495, %p496
    %p498 = scmp.ne.s32.totalorder %s490, %s493
    %p499 = scmp.eq.s32.totalorder %s36, 0
    %p500 = por %p498, %p499
    %p501 = scmp.ne.s32.totalorder %s490, %s493
    %p502 = scmp.eq.s32.totalorder %s41, 3
    %p503 = por %p501, %p502
    %p504 = scmp.ne.s32.totalorder %s493, %s494
    %p505 = scmp.eq.s32.totalorder %s41, 0
    %p506 = por %p504, %p505
    %p507 = scmp.ne.s32.totalorder %s493, %s494
    %p508 = scmp.eq.s32.totalorder %s42, 3
    %p509 = por %p507, %p508
    %p511 = scmp.ne.s32.totalorder %s494, %s510
    %p512 = scmp.eq.s32.totalorder %s42, 0
    %p513 = por %p511, %p512
    %s514 = ssub.s32 %s44, %s51
    %p515 = scmp.eq.s32.totalorder %s514, 0
    %s517 = sadd.s32 %s516, 1
    %s518 = scalar_select %p515, %s516, %s517
    %p521 = pneg %p515
    %p522 = scmp.eq.s32.totalorder %s36, 3
    %p523 = por %p521, %p522
    %p524 = scmp.ne.s32.totalorder %s516, %s519
    %p525 = scmp.eq.s32.totalorder %s36, 0
    %p526 = por %p524, %p525
    %p527 = scmp.ne.s32.totalorder %s516, %s519
    %p528 = scmp.eq.s32.totalorder %s41, 3
    %p529 = por %p527, %p528
    %p530 = scmp.ne.s32.totalorder %s519, %s520
    %p531 = scmp.eq.s32.totalorder %s41, 0
    %p532 = por %p530, %p531
    %p533 = scmp.ne.s32.totalorder %s519, %s520
    %p534 = scmp.eq.s32.totalorder %s42, 3
    %p535 = por %p533, %p534
    %p537 = scmp.ne.s32.totalorder %s520, %s536
    %p538 = scmp.eq.s32.totalorder %s42, 0
    %p539 = por %p537, %p538
    %s541 = sadd.s32 %s540, 1
    %p544 = scmp.eq.s32.totalorder %s36, 3
    %p545 = scmp.ne.s32.totalorder %s540, %s542
    %p546 = scmp.eq.s32.totalorder %s36, 0
    %p547 = por %p545, %p546
    %p548 = scmp.ne.s32.totalorder %s540, %s542
    %p549 = scmp.eq.s32.totalorder %s41, 3
    %p550 = por %p548, %p549
    %p551 = scmp.ne.s32.totalorder %s542, %s543
    %p552 = scmp.eq.s32.totalorder %s41, 0
    %p553 = por %p551, %p552
    %p554 = scmp.ne.s32.totalorder %s542, %s543
    %p555 = scmp.eq.s32.totalorder %s42, 3
    %p556 = por %p554, %p555
    %p558 = scmp.ne.s32.totalorder %s543, %s557
    %p559 = scmp.eq.s32.totalorder %s42, 0
    %p560 = por %p558, %p559
    %s562 = sadd.s32 %s561, 1
    %p565 = scmp.eq.s32.totalorder %s36, 3
    %p566 = scmp.ne.s32.totalorder %s561, %s563
    %p567 = scmp.eq.s32.totalorder %s36, 0
    %p568 = por %p566, %p567
    %p569 = scmp.ne.s32.totalorder %s561, %s563
    %p570 = scmp.eq.s32.totalorder %s41, 3
    %p571 = por %p569, %p570
    %p572 = scmp.ne.s32.totalorder %s563, %s564
    %p573 = scmp.eq.s32.totalorder %s41, 0
    %p574 = por %p572, %p573
    %p575 = scmp.ne.s32.totalorder %s563, %s564
    %p576 = scmp.eq.s32.totalorder %s42, 3
    %p577 = por %p575, %p576
    %p579 = scmp.ne.s32.totalorder %s564, %s578
    %p580 = scmp.eq.s32.totalorder %s42, 0
    %p581 = por %p579, %p580
    %s583 = sadd.s32 %s582, 1
    %p586 = scmp.eq.s32.totalorder %s36, 3
    %p587 = scmp.ne.s32.totalorder %s582, %s584
    %p588 = scmp.eq.s32.totalorder %s36, 0
    %p589 = por %p587, %p588
    %p590 = scmp.ne.s32.totalorder %s582, %s584
    %p591 = scmp.eq.s32.totalorder %s41, 3
    %p592 = por %p590, %p591
    %p593 = scmp.ne.s32.totalorder %s584, %s585
    %p594 = scmp.eq.s32.totalorder %s41, 0
    %p595 = por %p593, %p594
    %p596 = scmp.ne.s32.totalorder %s584, %s585
    %p597 = scmp.eq.s32.totalorder %s42, 3
    %p598 = por %p596, %p597
    %p600 = scmp.ne.s32.totalorder %s585, %s599
    %p601 = scmp.eq.s32.totalorder %s42, 0
    %p602 = por %p600, %p601
    %s604 = sadd.s32 %s603, 1
    %p607 = scmp.eq.s32.totalorder %s36, 3
    %p608 = scmp.ne.s32.totalorder %s603, %s605
    %p609 = scmp.eq.s32.totalorder %s36, 0
    %p610 = por %p608, %p609
    %p611 = scmp.ne.s32.totalorder %s603, %s605
    %p612 = scmp.eq.s32.totalorder %s41, 3
    %p613 = por %p611, %p612
    %p614 = scmp.ne.s32.totalorder %s605, %s606
    %p615 = scmp.eq.s32.totalorder %s41, 0
    %p616 = por %p614, %p615
    %p617 = scmp.ne.s32.totalorder %s605, %s606
    %p618 = scmp.eq.s32.totalorder %s42, 3
    %p619 = por %p617, %p618
    %p621 = scmp.ne.s32.totalorder %s606, %s620
    %p622 = scmp.eq.s32.totalorder %s42, 0
    %p623 = por %p621, %p622
    %s624 = ssub.s32 %s43, %s55
    %p625 = scmp.eq.s32.totalorder %s624, 0
    %s627 = sadd.s32 %s626, 1
    %s628 = scalar_select %p625, %s626, %s627
    %p631 = pneg %p625
    %p632 = scmp.eq.s32.totalorder %s36, 3
    %p633 = por %p631, %p632
    %p634 = scmp.ne.s32.totalorder %s626, %s629
    %p635 = scmp.eq.s32.totalorder %s36, 0
    %p636 = por %p634, %p635
    %p637 = scmp.ne.s32.totalorder %s626, %s629
    %p638 = scmp.eq.s32.totalorder %s41, 3
    %p639 = por %p637, %p638
    %p640 = scmp.ne.s32.totalorder %s629, %s630
    %p641 = scmp.eq.s32.totalorder %s41, 0
    %p642 = por %p640, %p641
    %p643 = scmp.ne.s32.totalorder %s629, %s630
    %p644 = scmp.eq.s32.totalorder %s42, 3
    %p645 = por %p643, %p644
    %p647 = scmp.ne.s32.totalorder %s630, %s646
    %p648 = scmp.eq.s32.totalorder %s42, 0
    %p649 = por %p647, %p648
    %p650 = scmp.le.s32.totalorder 1, %s36
    %p651 = scmp.lt.s32.totalorder %s36, 5
    %p652 = pnand %p650, %p651
    %p653 = pneg %p652
    // Predicated region
    $region9: #{bert_classifier_forward.1} parent=5 // pred_check
      _
    $region10: #{bert_classifier_forward.1} parent=5 // pred_check_branch
      %655 = sbr.rel (%p652) target = $region12
    $region11: #{bert_classifier_forward.1} parent=5 // pred_region
      %s656 = ssub.s32 %s36, 1
      // Predicated region
      $region13: #{bert_classifier_forward.1} parent=11 // pred_check
        %p657 = pneg %p95
      $region14: #{bert_classifier_forward.1} parent=11 // pred_check_branch
        %659 = sbr.rel (%p657) target = $region16
      $region15: #{bert_classifier_forward.1} parent=11 // pred_region
        _
      $region16: #{bert_classifier_forward.1} parent=11 // pred_fallthru
        _
      // Predicated region
      $region17: #{bert_classifier_forward.1} parent=11 // pred_check
        %p660 = pneg %p116
      $region18: #{bert_classifier_forward.1} parent=11 // pred_check_branch
        %662 = sbr.rel (%p660) target = $region20
      $region19: #{bert_classifier_forward.1} parent=11 // pred_region
        _
      $region20: #{bert_classifier_forward.1} parent=11 // pred_fallthru
        _
      // Predicated region
      $region21: #{bert_classifier_forward.1} parent=11 // pred_check
        %p663 = pneg %p553
      $region22: #{bert_classifier_forward.1} parent=11 // pred_check_branch
        %665 = sbr.rel (%p663) target = $region24
      $region23: #{bert_classifier_forward.1} parent=11 // pred_region
        _
      $region24: #{bert_classifier_forward.1} parent=11 // pred_fallthru
        _
      // Predicated region
      $region25: #{bert_classifier_forward.1} parent=11 // pred_check
        %p666 = pneg %p574
      $region26: #{bert_classifier_forward.1} parent=11 // pred_check_branch
        %668 = sbr.rel (%p666) target = $region28
      $region27: #{bert_classifier_forward.1} parent=11 // pred_region
        _
      $region28: #{bert_classifier_forward.1} parent=11 // pred_fallthru
        _
      // Predicated region
      $region29: #{bert_classifier_forward.1} parent=11 // pred_check
        %p669 = pneg %p595
      $region30: #{bert_classifier_forward.1} parent=11 // pred_check_branch
        %671 = sbr.rel (%p669) target = $region32
      $region31: #{bert_classifier_forward.1} parent=11 // pred_region
        _
      $region32: #{bert_classifier_forward.1} parent=11 // pred_fallthru
        _
      // Predicated region
      $region33: #{bert_classifier_forward.1} parent=11 // pred_check
        %p672 = pneg %p616
      $region34: #{bert_classifier_forward.1} parent=11 // pred_check_branch
        %674 = sbr.rel (%p672) target = $region36
      $region35: #{bert_classifier_forward.1} parent=11 // pred_region
        _
      $region36: #{bert_classifier_forward.1} parent=11 // pred_fallthru
        _
    $region12: #{bert_classifier_forward.1} parent=5 // pred_fallthru
      _
    %p675 = scmp.lt.s32.totalorder %s36, 4
    // Predicated region
    $region37: #{bert_classifier_forward.1} parent=5 // pred_check
      %p676 = pneg %p675
    $region38: #{bert_classifier_forward.1} parent=5 // pred_check_branch
      %678 = sbr.rel (%p676) target = $region40
    $region39: #{bert_classifier_forward.1} parent=5 // pred_region
      // Predicated region
      $region41: #{bert_classifier_forward.1} parent=39 // pred_check
        %p679 = pneg %p68
      $region42: #{bert_classifier_forward.1} parent=39 // pred_check_branch
        %681 = sbr.rel (%p679) target = $region44
      $region43: #{bert_classifier_forward.1} parent=39 // pred_region
        %p682 = scmp.lt.s32.totalorder %s43, 1
        %s683 = scalar_select %p682, %s43, 1
        %s684 = smul.addr %s683, 8
        %s685 = scalar_lea.vmem %s1, %s684
      $region44: #{bert_classifier_forward.1} parent=39 // pred_fallthru
        _
      // Predicated region
      $region45: #{bert_classifier_forward.1} parent=39 // pred_check
        %p686 = pneg %p136
      $region46: #{bert_classifier_forward.1} parent=39 // pred_check_branch
        %688 = sbr.rel (%p686) target = $region48
      $region47: #{bert_classifier_forward.1} parent=39 // pred_region
        %p689 = scmp.lt.s32.totalorder %s44, 1
        %s690 = scalar_select %p689, %s44, 1
        %s691 = smul.addr %s690, 8
        %s692 = smul.addr %s691, 4
        %s693 = scalar_lea.vmem %s4, %s692
      $region48: #{bert_classifier_forward.1} parent=39 // pred_fallthru
        _
      // Predicated region
      $region49: #{bert_classifier_forward.1} parent=39 // pred_check
        %p694 = pneg %p162
      $region50: #{bert_classifier_forward.1} parent=39 // pred_check_branch
        %696 = sbr.rel (%p694) target = $region52
      $region51: #{bert_classifier_forward.1} parent=39 // pred_region
        %p697 = scmp.lt.s32.totalorder %s44, 1
        %s698 = scalar_select %p697, %s44, 1
        %s699 = smul.addr %s698, 2
        %s700 = scalar_lea.vmem %s5, %s699
      $region52: #{bert_classifier_forward.1} parent=39 // pred_fallthru
        _
      // Predicated region
      $region53: #{bert_classifier_forward.1} parent=39 // pred_check
        %p701 = pneg %p188
      $region54: #{bert_classifier_forward.1} parent=39 // pred_check_branch
        %703 = sbr.rel (%p701) target = $region56
      $region55: #{bert_classifier_forward.1} parent=39 // pred_region
        %p704 = scmp.lt.s32.totalorder %s44, 1
        %s705 = scalar_select %p704, %s44, 1
        %s706 = smul.addr %s705, 8
        %s707 = smul.addr %s706, 4
        %s708 = scalar_lea.vmem %s6, %s707
      $region56: #{bert_classifier_forward.1} parent=39 // pred_fallthru
        _
      // Predicated region
      $region57: #{bert_classifier_forward.1} parent=39 // pred_check
        %p709 = pneg %p214
      $region58: #{bert_classifier_forward.1} parent=39 // pred_check_branch
        %711 = sbr.rel (%p709) target = $region60
      $region59: #{bert_classifier_forward.1} parent=39 // pred_region
        %p712 = scmp.lt.s32.totalorder %s44, 1
        %s713 = scalar_select %p712, %s44, 1
        %s714 = smul.addr %s713, 2
        %s715 = scalar_lea.vmem %s7, %s714
      $region60: #{bert_classifier_forward.1} parent=39 // pred_fallthru
        _
      // Predicated region
      $region61: #{bert_classifier_forward.1} parent=39 // pred_check
        %p716 = pneg %p240
      $region62: #{bert_classifier_forward.1} parent=39 // pred_check_branch
        %718 = sbr.rel (%p716) target = $region64
      $region63: #{bert_classifier_forward.1} parent=39 // pred_region
        %p719 = scmp.lt.s32.totalorder %s44, 1
        %s720 = scalar_select %p719, %s44, 1
        %s721 = smul.addr %s720, 8
        %s722 = smul.addr %s721, 4
        %s723 = scalar_lea.vmem %s8, %s722
      $region64: #{bert_classifier_forward.1} parent=39 // pred_fallthru
        _
      // Predicated region
      $region65: #{bert_classifier_forward.1} parent=39 // pred_check
        %p724 = pneg %p266
      $region66: #{bert_classifier_forward.1} parent=39 // pred_check_branch
        %726 = sbr.rel (%p724) target = $region68
      $region67: #{bert_classifier_forward.1} parent=39 // pred_region
        %p727 = scmp.lt.s32.totalorder %s44, 1
        %s728 = scalar_select %p727, %s44, 1
        %s729 = smul.addr %s728, 2
        %s730 = scalar_lea.vmem %s9, %s729
      $region68: #{bert_classifier_forward.1} parent=39 // pred_fallthru
        _
      // Predicated region
      $region69: #{bert_classifier_forward.1} parent=39 // pred_check
        %p731 = pneg %p292
      $region70: #{bert_classifier_forward.1} parent=39 // pred_check_branch
        %733 = sbr.rel (%p731) target = $region72
      $region71: #{bert_classifier_forward.1} parent=39 // pred_region
        %p734 = scmp.lt.s32.totalorder %s44, 1
        %s735 = scalar_select %p734, %s44, 1
        %s736 = smul.addr %s735, 4
        %s737 = smul.addr %s736, 4
        %s738 = scalar_lea.vmem %s10, %s737
      $region72: #{bert_classifier_forward.1} parent=39 // pred_fallthru
        _
      // Predicated region
      $region73: #{bert_classifier_forward.1} parent=39 // pred_check
        %p739 = pneg %p318
      $region74: #{bert_classifier_forward.1} parent=39 // pred_check_branch
        %741 = sbr.rel (%p739) target = $region76
      $region75: #{bert_classifier_forward.1} parent=39 // pred_region
        %p742 = scmp.lt.s32.totalorder %s44, 1
        %s743 = scalar_select %p742, %s44, 1
        %s744 = scalar_lea.vmem %s11, %s743
      $region76: #{bert_classifier_forward.1} parent=39 // pred_fallthru
        _
      // Predicated region
      $region77: #{bert_classifier_forward.1} parent=39 // pred_check
        %p745 = pneg %p344
      $region78: #{bert_classifier_forward.1} parent=39 // pred_check_branch
        %747 = sbr.rel (%p745) target = $region80
      $region79: #{bert_classifier_forward.1} parent=39 // pred_region
        %p748 = scmp.lt.s32.totalorder %s44, 1
        %s749 = scalar_select %p748, %s44, 1
        %s750 = scalar_lea.vmem %s12, %s749
      $region80: #{bert_classifier_forward.1} parent=39 // pred_fallthru
        _
      // Predicated region
      $region81: #{bert_classifier_forward.1} parent=39 // pred_check
        %p751 = pneg %p370
      $region82: #{bert_classifier_forward.1} parent=39 // pred_check_branch
        %753 = sbr.rel (%p751) target = $region84
      $region83: #{bert_classifier_forward.1} parent=39 // pred_region
        %p754 = scmp.lt.s32.totalorder %s44, 1
        %s755 = scalar_select %p754, %s44, 1
        %s756 = scalar_lea.vmem %s13, %s755
      $region84: #{bert_classifier_forward.1} parent=39 // pred_fallthru
        _
      // Predicated region
      $region85: #{bert_classifier_forward.1} parent=39 // pred_check
        %p757 = pneg %p396
      $region86: #{bert_classifier_forward.1} parent=39 // pred_check_branch
        %759 = sbr.rel (%p757) target = $region88
      $region87: #{bert_classifier_forward.1} parent=39 // pred_region
        %p760 = scmp.lt.s32.totalorder %s44, 1
        %s761 = scalar_select %p760, %s44, 1
        %s762 = smul.addr %s761, 4
        %s763 = smul.addr %s762, 4
        %s764 = scalar_lea.vmem %s14, %s763
      $region88: #{bert_classifier_forward.1} parent=39 // pred_fallthru
        _
      // Predicated region
      $region89: #{bert_classifier_forward.1} parent=39 // pred_check
        %p765 = pneg %p422
      $region90: #{bert_classifier_forward.1} parent=39 // pred_check_branch
        %767 = sbr.rel (%p765) target = $region92
      $region91: #{bert_classifier_forward.1} parent=39 // pred_region
        %p768 = scmp.lt.s32.totalorder %s44, 1
        %s769 = scalar_select %p768, %s44, 1
        %s770 = scalar_lea.vmem %s15, %s769
      $region92: #{bert_classifier_forward.1} parent=39 // pred_fallthru
        _
      // Predicated region
      $region93: #{bert_classifier_forward.1} parent=39 // pred_check
        %p771 = pneg %p448
      $region94: #{bert_classifier_forward.1} parent=39 // pred_check_branch
        %773 = sbr.rel (%p771) target = $region96
      $region95: #{bert_classifier_forward.1} parent=39 // pred_region
        %p774 = scmp.lt.s32.totalorder %s44, 1
        %s775 = scalar_select %p774, %s44, 1
        %s776 = smul.addr %s775, 8
        %s777 = smul.addr %s776, 4
        %s778 = scalar_lea.vmem %s16, %s777
      $region96: #{bert_classifier_forward.1} parent=39 // pred_fallthru
        _
      // Predicated region
      $region97: #{bert_classifier_forward.1} parent=39 // pred_check
        %p779 = pneg %p474
      $region98: #{bert_classifier_forward.1} parent=39 // pred_check_branch
        %781 = sbr.rel (%p779) target = $region100
      $region99: #{bert_classifier_forward.1} parent=39 // pred_region
        %p782 = scmp.lt.s32.totalorder %s44, 1
        %s783 = scalar_select %p782, %s44, 1
        %s784 = scalar_lea.vmem %s17, %s783
      $region100: #{bert_classifier_forward.1} parent=39 // pred_fallthru
        _
      // Predicated region
      $region101: #{bert_classifier_forward.1} parent=39 // pred_check
        %p785 = pneg %p500
      $region102: #{bert_classifier_forward.1} parent=39 // pred_check_branch
        %787 = sbr.rel (%p785) target = $region104
      $region103: #{bert_classifier_forward.1} parent=39 // pred_region
        %p788 = scmp.lt.s32.totalorder %s44, 1
        %s789 = scalar_select %p788, %s44, 1
        %s790 = scalar_lea.vmem %s18, %s789
      $region104: #{bert_classifier_forward.1} parent=39 // pred_fallthru
        _
      // Predicated region
      $region105: #{bert_classifier_forward.1} parent=39 // pred_check
        %p791 = pneg %p526
      $region106: #{bert_classifier_forward.1} parent=39 // pred_check_branch
        %793 = sbr.rel (%p791) target = $region108
      $region107: #{bert_classifier_forward.1} parent=39 // pred_region
        %p794 = scmp.lt.s32.totalorder %s44, 1
        %s795 = scalar_select %p794, %s44, 1
        %s796 = scalar_lea.vmem %s19, %s795
      $region108: #{bert_classifier_forward.1} parent=39 // pred_fallthru
        _
    $region40: #{bert_classifier_forward.1} parent=5 // pred_fallthru
      _
    %p797 = scmp.le.s32.totalorder 1, %s36
    %p798 = scmp.lt.s32.totalorder %s36, 5
    %p799 = pnand %p797, %p798
    %p800 = pneg %p799
    // Predicated region
    $region109: #{bert_classifier_forward.1} parent=5 // pred_check
      _
    $region110: #{bert_classifier_forward.1} parent=5 // pred_check_branch
      %802 = sbr.rel (%p799) target = $region112
    $region111: #{bert_classifier_forward.1} parent=5 // pred_region
      %s803 = ssub.s32 %s36, 1
      %p804 = scmp.lt.s32.totalorder %s45, 1
      %s805 = scalar_select %p804, %s45, 1
      %s806 = smul.addr %s805, 8
      %s807 = scalar_lea.vmem %s1, %s806
      %p808 = pneg %p74
      %p809 = pneg %p71
      %p810 = pneg %p95
      %p811 = pneg %p92
      %p812 = pneg %p116
      %p813 = pneg %p113
      %p814 = scmp.lt.s32.totalorder %s46, 1
      %s815 = scalar_select %p814, %s46, 1
      %s816 = smul.addr %s815, 8
      %s817 = smul.addr %s816, 4
      %s818 = scalar_lea.vmem %s4, %s817
      %p819 = pneg %p142
      %p820 = pneg %p139
      %p821 = scmp.lt.s32.totalorder %s46, 1
      %s822 = scalar_select %p821, %s46, 1
      %s823 = smul.addr %s822, 2
      %s824 = scalar_lea.vmem %s5, %s823
      %p825 = pneg %p168
      %p826 = pneg %p165
      %p827 = scmp.lt.s32.totalorder %s46, 1
      %s828 = scalar_select %p827, %s46, 1
      %s829 = smul.addr %s828, 8
      %s830 = smul.addr %s829, 4
      %s831 = scalar_lea.vmem %s6, %s830
      %p832 = pneg %p194
      %p833 = pneg %p191
      %p834 = scmp.lt.s32.totalorder %s46, 1
      %s835 = scalar_select %p834, %s46, 1
      %s836 = smul.addr %s835, 2
      %s837 = scalar_lea.vmem %s7, %s836
      %p838 = pneg %p220
      %p839 = pneg %p217
      %p840 = scmp.lt.s32.totalorder %s46, 1
      %s841 = scalar_select %p840, %s46, 1
      %s842 = smul.addr %s841, 8
      %s843 = smul.addr %s842, 4
      %s844 = scalar_lea.vmem %s8, %s843
      %p845 = pneg %p246
      %p846 = pneg %p243
      %p847 = scmp.lt.s32.totalorder %s46, 1
      %s848 = scalar_select %p847, %s46, 1
      %s849 = smul.addr %s848, 2
      %s850 = scalar_lea.vmem %s9, %s849
      %p851 = pneg %p272
      %p852 = pneg %p269
      %p853 = scmp.lt.s32.totalorder %s46, 1
      %s854 = scalar_select %p853, %s46, 1
      %s855 = smul.addr %s854, 4
      %s856 = smul.addr %s855, 4
      %s857 = scalar_lea.vmem %s10, %s856
      %p858 = pneg %p298
      %p859 = pneg %p295
      %p860 = scmp.lt.s32.totalorder %s46, 1
      %s861 = scalar_select %p860, %s46, 1
      %s862 = scalar_lea.vmem %s11, %s861
      %p863 = pneg %p324
      %p864 = pneg %p321
      %p865 = scmp.lt.s32.totalorder %s46, 1
      %s866 = scalar_select %p865, %s46, 1
      %s867 = scalar_lea.vmem %s12, %s866
      %p868 = pneg %p350
      %p869 = pneg %p347
      %p870 = scmp.lt.s32.totalorder %s46, 1
      %s871 = scalar_select %p870, %s46, 1
      %s872 = scalar_lea.vmem %s13, %s871
      %p873 = pneg %p376
      %p874 = pneg %p373
      %p875 = scmp.lt.s32.totalorder %s46, 1
      %s876 = scalar_select %p875, %s46, 1
      %s877 = smul.addr %s876, 4
      %s878 = smul.addr %s877, 4
      %s879 = scalar_lea.vmem %s14, %s878
      %p880 = pneg %p402
      %p881 = pneg %p399
      %p882 = scmp.lt.s32.totalorder %s46, 1
      %s883 = scalar_select %p882, %s46, 1
      %s884 = scalar_lea.vmem %s15, %s883
      %p885 = pneg %p428
      %p886 = pneg %p425
      %p887 = scmp.lt.s32.totalorder %s46, 1
      %s888 = scalar_select %p887, %s46, 1
      %s889 = smul.addr %s888, 8
      %s890 = smul.addr %s889, 4
      %s891 = scalar_lea.vmem %s16, %s890
      %p892 = pneg %p454
      %p893 = pneg %p451
      %p894 = scmp.lt.s32.totalorder %s46, 1
      %s895 = scalar_select %p894, %s46, 1
      %s896 = scalar_lea.vmem %s17, %s895
      %p897 = pneg %p480
      %p898 = pneg %p477
      %p899 = scmp.lt.s32.totalorder %s46, 1
      %s900 = scalar_select %p899, %s46, 1
      %s901 = scalar_lea.vmem %s18, %s900
      %p902 = pneg %p506
      %p903 = pneg %p503
      %p904 = scmp.lt.s32.totalorder %s46, 1
      %s905 = scalar_select %p904, %s46, 1
      %s906 = scalar_lea.vmem %s19, %s905
      %p907 = pneg %p532
      %p908 = pneg %p529
      %p909 = pneg %p553
      %p910 = pneg %p550
      %p911 = pneg %p574
      %p912 = pneg %p571
      %p913 = pneg %p595
      %p914 = pneg %p592
      %p915 = pneg %p616
      %p916 = pneg %p613
      %p917 = pneg %p642
      %p918 = pneg %p639
      %p919 = scmp.lt.s32.totalorder %s45, 1
      %s920 = scalar_select %p919, %s45, 1
      %s921 = smul.addr %s920, 8
      %s922 = scalar_lea.vmem %s24, %s921
      %p923 = scmp.lt.s32.totalorder %s45, 1
      %s924 = scalar_select %p923, %s45, 1
      %s925 = smul.addr %s924, 8
      %s926 = scalar_lea.vmem %s1, %s925
      %p927 = scmp.lt.s32.totalorder %s46, 1
      %s928 = scalar_select %p927, %s46, 1
      %s929 = smul.addr %s928, 8
      %s930 = smul.addr %s929, 4
      %s931 = scalar_lea.vmem %s4, %s930
      %p932 = scmp.lt.s32.totalorder %s46, 1
      %s933 = scalar_select %p932, %s46, 1
      %s934 = smul.addr %s933, 2
      %s935 = scalar_lea.vmem %s5, %s934
      %p936 = scmp.lt.s32.totalorder %s46, 1
      %s937 = scalar_select %p936, %s46, 1
      %s938 = smul.addr %s937, 8
      %s939 = smul.addr %s938, 4
      %s940 = scalar_lea.vmem %s6, %s939
      %p941 = scmp.lt.s32.totalorder %s46, 1
      %s942 = scalar_select %p941, %s46, 1
      %s943 = smul.addr %s942, 2
      %s944 = scalar_lea.vmem %s7, %s943
      %p945 = scmp.lt.s32.totalorder %s46, 1
      %s946 = scalar_select %p945, %s46, 1
      %s947 = smul.addr %s946, 8
      %s948 = smul.addr %s947, 4
      %s949 = scalar_lea.vmem %s8, %s948
      %p950 = scmp.lt.s32.totalorder %s46, 1
      %s951 = scalar_select %p950, %s46, 1
      %s952 = smul.addr %s951, 2
      %s953 = scalar_lea.vmem %s9, %s952
      %p954 = scmp.lt.s32.totalorder %s46, 1
      %s955 = scalar_select %p954, %s46, 1
      %s956 = smul.addr %s955, 4
      %s957 = smul.addr %s956, 4
      %s958 = scalar_lea.vmem %s10, %s957
      %p959 = scmp.lt.s32.totalorder %s46, 1
      %s960 = scalar_select %p959, %s46, 1
      %s961 = scalar_lea.vmem %s11, %s960
      %p962 = scmp.lt.s32.totalorder %s46, 1
      %s963 = scalar_select %p962, %s46, 1
      %s964 = scalar_lea.vmem %s12, %s963
      %p965 = scmp.lt.s32.totalorder %s46, 1
      %s966 = scalar_select %p965, %s46, 1
      %s967 = scalar_lea.vmem %s13, %s966
      %p968 = scmp.lt.s32.totalorder %s46, 1
      %s969 = scalar_select %p968, %s46, 1
      %s970 = smul.addr %s969, 4
      %s971 = smul.addr %s970, 4
      %s972 = scalar_lea.vmem %s14, %s971
      %p973 = scmp.lt.s32.totalorder %s46, 1
      %s974 = scalar_select %p973, %s46, 1
      %s975 = scalar_lea.vmem %s15, %s974
      %p976 = scmp.lt.s32.totalorder %s46, 1
      %s977 = scalar_select %p976, %s46, 1
      %s978 = smul.addr %s977, 8
      %s979 = smul.addr %s978, 4
      %s980 = scalar_lea.vmem %s16, %s979
      %p981 = scmp.lt.s32.totalorder %s46, 1
      %s982 = scalar_select %p981, %s46, 1
      %s983 = scalar_lea.vmem %s17, %s982
      %p984 = scmp.lt.s32.totalorder %s46, 1
      %s985 = scalar_select %p984, %s46, 1
      %s986 = scalar_lea.vmem %s18, %s985
      %p987 = scmp.lt.s32.totalorder %s46, 1
      %s988 = scalar_select %p987, %s46, 1
      %s989 = scalar_lea.vmem %s19, %s988
      %p990 = scmp.lt.s32.totalorder %s45, 1
      %s991 = scalar_select %p990, %s45, 1
      %s992 = smul.addr %s991, 8
      %s993 = scalar_lea.vmem %s24, %s992
      %p995 = scmp.eq.s32.totalorder %s46, 0
      // Predicated region
      $region113: #{bert_classifier_forward.1} parent=111 // pred_check
        %p996 = pneg %p995
      $region114: #{bert_classifier_forward.1} parent=111 // pred_check_branch
        %998 = sbr.rel (%p996) target = $region116
      $region115: #{bert_classifier_forward.1} parent=111 // pred_region
        %v999 = vld [vmem:[%s926] sm:$0xff]
        %v1000 = vld [vmem:[%s2] sm:$0x1]
        %v1001 = vld [vmem:[%s3] sm:$0x1]
        %vm1002 = vcmask 261120
        %v1003 = vsel %vm1002, %v999, 0.0
        %1004 = vadd.xlane.f32.xlu0 %v1003
        %v1005 = vpop.xlane.xlu0 %1004
        %v1006 = vrcp.pop 32.0
        %v1007 = vmul.f32 %v1005, %v1006
        %v1008 = vsub.f32 %v999, %v1007
        %v1009 = vmul.f32 %v1008, %v1008
        %v1010 = vsel %vm1002, %v1009, 0.0
        %1011 = vadd.xlane.f32.xlu0 %v1010
        %v1012 = vpop.xlane.xlu0 %1011
        %v1013 = vmul.f32 %v1012, %v1006
        %v1014 = vadd.f32 %v1013, 1e-12
        %v1015 = vrsqrt.pop %v1014
        %v1016 = vmul.f32 %v1008, %v1015
        %v1018 = vlaneseq
        %v1019 = vshrl.u32 %v1018, 7
        %v1020 = vsub.s32 0, %v1019
        %v1021 = vrot.slane %v1000, %v1020
        %v1023 = vmul.f32 %v1016, %v1021
        %v1025 = vlaneseq
        %v1026 = vshrl.u32 %v1025, 7
        %v1027 = vsub.s32 0, %v1026
        %v1028 = vrot.slane %v1001, %v1027
        %v1030 = vadd.f32 %v1023, %v1028
        %1031 = vst.msk [vmem:[#allocation2] sm:$0xff] %vm1002, %v1030
      $region116: #{bert_classifier_forward.1} parent=111 // pred_fallthru
        _
      %v1032 = vld [vmem:[#allocation2] sm:$0xff]
      %v1033 = vpack.c.bf16 %v1032, %v1032
      %v1034 = vlaneseq
      %v1035 = vand.u32 %v1034, 127
      %s1036 = sld [smem:[#allocation4 + %s45]]
      %v1037 = vstv %s1036
      %vm1038 = vcmp.lt.s32.totalorder %v1035, %v1037
      %v1039 = vsel %vm1038, 0.0, -10000.0
      %v1040 = vld [vmem:[%s931] sm:$0xf]
      %v1041 = vld [vmem:[%s931 + $0x4] sm:$0xf]
      %v1042 = vld [vmem:[%s931 + $0x8] sm:$0xf]
      %v1043 = vld [vmem:[%s931 + $0xc] sm:$0xf]
      %v1044 = vld [vmem:[%s931 + $0x10] sm:$0xf]
      %v1045 = vld [vmem:[%s931 + $0x14] sm:$0xf]
      %v1046 = vld [vmem:[%s931 + $0x18] sm:$0xf]
      %v1047 = vld [vmem:[%s931 + $0x1c] sm:$0xf]
      %v1048 = vld [vmem:[%s935] sm:$0x1]
      %v1049 = vld [vmem:[%s935 + $0x1] sm:$0x1]
      %v1052 = vlaneseq
      %v1053 = vshrl.u32 %v1052, 7
      %v1054 = vsub.s32 0, %v1053
      %v1055 = vrot.slane %v1048, %v1054
      %v1056 = vlaneseq
      %v1057 = vshrl.u32 %v1056, 7
      %v1058 = vsub.s32 0, %v1057
      %v1059 = vrot.slane %v1049, %v1058
      %v1066 = vunpack.c.l.b16 %v1040
      %v1067 = vunpack.c.l.b16 %v1041
      %v1068 = vunpack.c.l.b16 %v1042
      %v1069 = vunpack.c.l.b16 %v1043
      %v1070 = vpack.c.b16 %v1067, %v1066
      %v1071 = vpack.c.b16 %v1069, %v1068
      %vm1074 = vcmask 261120
      %v1076 = vsel %vm1074, %v1033, 0
      %1078 = vmatprep.subr.bf16.mxu0 0
      %1079 = vmatpush1.bf16.msra.mxu0 %v1070
      %1080 = vmatprep.subr.bf16.mxu0 0
      %1081 = vmatpush1.bf16.msra.mxu0 %v1071
      %1082 = vmatprep.subr.bf16.mxu0 0
      %1083 = vmatpush1.bf16.msra.mxu0 0
      %1084 = vmatprep.subr.bf16.mxu0 0
      %1085 = vmatpush1.bf16.msra.mxu0 0
      %1086 = vmatprep.subr.bf16.mxu0 0
      %1087 = vmatpush1.bf16.msra.mxu0 0
      %1088 = vmatprep.subr.bf16.mxu0 0
      %1089 = vmatpush1.bf16.msra.mxu0 0
      %1090 = vmatprep.subr.bf16.mxu0 0
      %1091 = vmatpush1.bf16.msra.mxu0 0
      %1092 = vmatprep.subr.bf16.mxu0 0
      %1093 = vmatpush1.bf16.msra.mxu0 0
      %1094 = vmatprep.subr.bf16.mxu0 0
      %1095 = vmatpush1.bf16.msra.mxu0 0
      %1096 = vmatprep.subr.bf16.mxu0 0
      %1097 = vmatpush1.bf16.msra.mxu0 0
      %1098 = vmatprep.subr.bf16.mxu0 0
      %1099 = vmatpush1.bf16.msra.mxu0 0
      %1100 = vmatprep.subr.bf16.mxu0 0
      %1101 = vmatpush1.bf16.msra.mxu0 0
      %1102 = vmatprep.subr.bf16.mxu0 0
      %1103 = vmatpush1.bf16.msra.mxu0 0
      %1104 = vmatprep.subr.bf16.mxu0 0
      %1105 = vmatpush1.bf16.msra.mxu0 0
      %1106 = vmatprep.subr.bf16.mxu0 0
      %1107 = vmatpush1.bf16.msra.mxu0 0
      %1108 = vmatprep.subr.bf16.mxu0 0
      %1109 = vmatpush1.bf16.msra.mxu0 0
      %1110 = vmatprep.mubr.bf16.mxu0 0
      %1111 = vmatmul.mubr.bf16.gmra.mrb[0].mxu0 %v1076
      %v1112 = vpop.f32.mrb[0].mxu0
      %v1113 = vadd.f32 %v1055, %v1112
      %v1114 = vpop.f32.mrb[0].mxu0
      %v1115 = vpop.f32.mrb[0].mxu0
      %v1116 = vpop.f32.mrb[0].mxu0
      %1117 = vdwg.mxu0
      %v1122 = vunpack.c.l.b16 %v1044
      %v1123 = vunpack.c.l.b16 %v1045
      %v1124 = vunpack.c.l.b16 %v1046
      %v1125 = vunpack.c.l.b16 %v1047
      %v1126 = vpack.c.b16 %v1123, %v1122
      %v1127 = vpack.c.b16 %v1125, %v1124
      %1130 = vmatprep.subr.bf16.mxu0 0
      %1131 = vmatpush1.bf16.msra.mxu0 %v1126
      %1132 = vmatprep.subr.bf16.mxu0 0
      %1133 = vmatpush1.bf16.msra.mxu0 %v1127
      %1134 = vmatprep.subr.bf16.mxu0 0
      %1135 = vmatpush1.bf16.msra.mxu0 0
      %1136 = vmatprep.subr.bf16.mxu0 0
      %1137 = vmatpush1.bf16.msra.mxu0 0
      %1138 = vmatprep.subr.bf16.mxu0 0
      %1139 = vmatpush1.bf16.msra.mxu0 0
      %1140 = vmatprep.subr.bf16.mxu0 0
      %1141 = vmatpush1.bf16.msra.mxu0 0
      %1142 = vmatprep.subr.bf16.mxu0 0
      %1143 = vmatpush1.bf16.msra.mxu0 0
      %1144 = vmatprep.subr.bf16.mxu0 0
      %1145 = vmatpush1.bf16.msra.mxu0 0
      %1146 = vmatprep.subr.bf16.mxu0 0
      %1147 = vmatpush1.bf16.msra.mxu0 0
      %1148 = vmatprep.subr.bf16.mxu0 0
      %1149 = vmatpush1.bf16.msra.mxu0 0
      %1150 = vmatprep.subr.bf16.mxu0 0
      %1151 = vmatpush1.bf16.msra.mxu0 0
      %1152 = vmatprep.subr.bf16.mxu0 0
      %1153 = vmatpush1.bf16.msra.mxu0 0
      %1154 = vmatprep.subr.bf16.mxu0 0
      %1155 = vmatpush1.bf16.msra.mxu0 0
      %1156 = vmatprep.subr.bf16.mxu0 0
      %1157 = vmatpush1.bf16.msra.mxu0 0
      %1158 = vmatprep.subr.bf16.mxu0 0
      %1159 = vmatpush1.bf16.msra.mxu0 0
      %1160 = vmatprep.subr.bf16.mxu0 0
      %1161 = vmatpush1.bf16.msra.mxu0 0
      %1162 = vmatprep.mubr.bf16.mxu0 0
      %1163 = vmatmul.mubr.bf16.gmra.mrb[0].mxu0 %v1076
      %v1164 = vpop.f32.mrb[0].mxu0
      %v1165 = vadd.f32 %v1059, %v1164
      %v1166 = vpop.f32.mrb[0].mxu0
      %v1167 = vpop.f32.mrb[0].mxu0
      %v1168 = vpop.f32.mrb[0].mxu0
      %1169 = vdwg.mxu0
      %v1170 = vmul.f32 %v1113, 0.25
      %v1171 = vmul.f32 %v1165, 0.25
      %v1172 = vld [vmem:[%s940] sm:$0xf]
      %v1173 = vld [vmem:[%s940 + $0x4] sm:$0xf]
      %v1174 = vld [vmem:[%s940 + $0x8] sm:$0xf]
      %v1175 = vld [vmem:[%s940 + $0xc] sm:$0xf]
      %v1176 = vld [vmem:[%s940 + $0x10] sm:$0xf]
      %v1177 = vld [vmem:[%s940 + $0x14] sm:$0xf]
      %v1178 = vld [vmem:[%s940 + $0x18] sm:$0xf]
      %v1179 = vld [vmem:[%s940 + $0x1c] sm:$0xf]
      %v1180 = vld [vmem:[%s944] sm:$0x1]
      %v1181 = vld [vmem:[%s944 + $0x1] sm:$0x1]
      %v1184 = vlaneseq
      %v1185 = vshrl.u32 %v1184, 7
      %v1186 = vsub.s32 0, %v1185
      %v1187 = vrot.slane %v1180, %v1186
      %v1188 = vlaneseq
      %v1189 = vshrl.u32 %v1188, 7
      %v1190 = vsub.s32 0, %v1189
      %v1191 = vrot.slane %v1181, %v1190
      %v1198 = vunpack.c.l.b16 %v1172
      %v1199 = vunpack.c.l.b16 %v1173
      %v1200 = vunpack.c.l.b16 %v1174
      %v1201 = vunpack.c.l.b16 %v1175
      %v1202 = vpack.c.b16 %v1199, %v1198
      %v1203 = vpack.c.b16 %v1201, %v1200
      %1206 = vmatprep.subr.bf16.mxu0 0
      %1207 = vmatpush1.bf16.msra.mxu0 %v1202
      %1208 = vmatprep.subr.bf16.mxu0 0
      %1209 = vmatpush1.bf16.msra.mxu0 %v1203
      %1210 = vmatprep.subr.bf16.mxu0 0
      %1211 = vmatpush1.bf16.msra.mxu0 0
      %1212 = vmatprep.subr.bf16.mxu0 0
      %1213 = vmatpush1.bf16.msra.mxu0 0
      %1214 = vmatprep.subr.bf16.mxu0 0
      %1215 = vmatpush1.bf16.msra.mxu0 0
      %1216 = vmatprep.subr.bf16.mxu0 0
      %1217 = vmatpush1.bf16.msra.mxu0 0
      %1218 = vmatprep.subr.bf16.mxu0 0
      %1219 = vmatpush1.bf16.msra.mxu0 0
      %1220 = vmatprep.subr.bf16.mxu0 0
      %1221 = vmatpush1.bf16.msra.mxu0 0
      %1222 = vmatprep.subr.bf16.mxu0 0
      %1223 = vmatpush1.bf16.msra.mxu0 0
      %1224 = vmatprep.subr.bf16.mxu0 0
      %1225 = vmatpush1.bf16.msra.mxu0 0
      %1226 = vmatprep.subr.bf16.mxu0 0
      %1227 = vmatpush1.bf16.msra.mxu0 0
      %1228 = vmatprep.subr.bf16.mxu0 0
      %1229 = vmatpush1.bf16.msra.mxu0 0
      %1230 = vmatprep.subr.bf16.mxu0 0
      %1231 = vmatpush1.bf16.msra.mxu0 0
      %1232 = vmatprep.subr.bf16.mxu0 0
      %1233 = vmatpush1.bf16.msra.mxu0 0
      %1234 = vmatprep.subr.bf16.mxu0 0
      %1235 = vmatpush1.bf16.msra.mxu0 0
      %1236 = vmatprep.subr.bf16.mxu0 0
      %1237 = vmatpush1.bf16.msra.mxu0 0
      %1238 = vmatprep.mubr.bf16.mxu0 0
      %1239 = vmatmul.mubr.bf16.gmra.mrb[0].mxu0 %v1076
      %v1240 = vpop.f32.mrb[0].mxu0
      %v1241 = vadd.f32 %v1187, %v1240
      %v1242 = vpop.f32.mrb[0].mxu0
      %v1243 = vpop.f32.mrb[0].mxu0
      %v1244 = vpop.f32.mrb[0].mxu0
      %1245 = vdwg.mxu0
      %v1250 = vunpack.c.l.b16 %v1176
      %v1251 = vunpack.c.l.b16 %v1177
      %v1252 = vunpack.c.l.b16 %v1178
      %v1253 = vunpack.c.l.b16 %v1179
      %v1254 = vpack.c.b16 %v1251, %v1250
      %v1255 = vpack.c.b16 %v1253, %v1252
      %1258 = vmatprep.subr.bf16.mxu0 0
      %1259 = vmatpush1.bf16.msra.mxu0 %v1254
      %1260 = vmatprep.subr.bf16.mxu0 0
      %1261 = vmatpush1.bf16.msra.mxu0 %v1255
      %1262 = vmatprep.subr.bf16.mxu0 0
      %1263 = vmatpush1.bf16.msra.mxu0 0
      %1264 = vmatprep.subr.bf16.mxu0 0
      %1265 = vmatpush1.bf16.msra.mxu0 0
      %1266 = vmatprep.subr.bf16.mxu0 0
      %1267 = vmatpush1.bf16.msra.mxu0 0
      %1268 = vmatprep.subr.bf16.mxu0 0
      %1269 = vmatpush1.bf16.msra.mxu0 0
      %1270 = vmatprep.subr.bf16.mxu0 0
      %1271 = vmatpush1.bf16.msra.mxu0 0
      %1272 = vmatprep.subr.bf16.mxu0 0
      %1273 = vmatpush1.bf16.msra.mxu0 0
      %1274 = vmatprep.subr.bf16.mxu0 0
      %1275 = vmatpush1.bf16.msra.mxu0 0
      %1276 = vmatprep.subr.bf16.mxu0 0
      %1277 = vmatpush1.bf16.msra.mxu0 0
      %1278 = vmatprep.subr.bf16.mxu0 0
      %1279 = vmatpush1.bf16.msra.mxu0 0
      %1280 = vmatprep.subr.bf16.mxu0 0
      %1281 = vmatpush1.bf16.msra.mxu0 0
      %1282 = vmatprep.subr.bf16.mxu0 0
      %1283 = vmatpush1.bf16.msra.mxu0 0
      %1284 = vmatprep.subr.bf16.mxu0 0
      %1285 = vmatpush1.bf16.msra.mxu0 0
      %1286 = vmatprep.subr.bf16.mxu0 0
      %1287 = vmatpush1.bf16.msra.mxu0 0
      %1288 = vmatprep.subr.bf16.mxu0 0
      %1289 = vmatpush1.bf16.msra.mxu0 0
      %1290 = vmatprep.mubr.bf16.mxu0 0
      %1291 = vmatmul.mubr.bf16.gmra.mrb[0].mxu0 %v1076
      %v1292 = vpop.f32.mrb[0].mxu0
      %v1293 = vadd.f32 %v1191, %v1292
      %v1294 = vpop.f32.mrb[0].mxu0
      %v1295 = vpop.f32.mrb[0].mxu0
      %v1296 = vpop.f32.mrb[0].mxu0
      %1297 = vdwg.mxu0
      %v1298 = vld [vmem:[%s949] sm:$0xf]
      %v1299 = vld [vmem:[%s949 + $0x4] sm:$0xf]
      %v1300 = vld [vmem:[%s949 + $0x8] sm:$0xf]
      %v1301 = vld [vmem:[%s949 + $0xc] sm:$0xf]
      %v1302 = vld [vmem:[%s949 + $0x10] sm:$0xf]
      %v1303 = vld [vmem:[%s949 + $0x14] sm:$0xf]
      %v1304 = vld [vmem:[%s949 + $0x18] sm:$0xf]
      %v1305 = vld [vmem:[%s949 + $0x1c] sm:$0xf]
      %v1306 = vld [vmem:[%s953] sm:$0x1]
      %v1307 = vld [vmem:[%s953 + $0x1] sm:$0x1]
      %v1310 = vlaneseq
      %v1311 = vshrl.u32 %v1310, 7
      %v1312 = vsub.s32 0, %v1311
      %v1313 = vrot.slane %v1306, %v1312
      %v1314 = vlaneseq
      %v1315 = vshrl.u32 %v1314, 7
      %v1316 = vsub.s32 0, %v1315
      %v1317 = vrot.slane %v1307, %v1316
      %v1324 = vunpack.c.l.b16 %v1298
      %v1325 = vunpack.c.l.b16 %v1299
      %v1326 = vunpack.c.l.b16 %v1300
      %v1327 = vunpack.c.l.b16 %v1301
      %v1328 = vpack.c.b16 %v1325, %v1324
      %v1329 = vpack.c.b16 %v1327, %v1326
      %1332 = vmatprep.subr.bf16.mxu0 0
      %1333 = vmatpush1.bf16.msra.mxu0 %v1328
      %1334 = vmatprep.subr.bf16.mxu0 0
      %1335 = vmatpush1.bf16.msra.mxu0 %v1329
      %1336 = vmatprep.subr.bf16.mxu0 0
      %1337 = vmatpush1.bf16.msra.mxu0 0
      %1338 = vmatprep.subr.bf16.mxu0 0
      %1339 = vmatpush1.bf16.msra.mxu0 0
      %1340 = vmatprep.subr.bf16.mxu0 0
      %1341 = vmatpush1.bf16.msra.mxu0 0
      %1342 = vmatprep.subr.bf16.mxu0 0
      %1343 = vmatpush1.bf16.msra.mxu0 0
      %1344 = vmatprep.subr.bf16.mxu0 0
      %1345 = vmatpush1.bf16.msra.mxu0 0
      %1346 = vmatprep.subr.bf16.mxu0 0
      %1347 = vmatpush1.bf16.msra.mxu0 0
      %1348 = vmatprep.subr.bf16.mxu0 0
      %1349 = vmatpush1.bf16.msra.mxu0 0
      %1350 = vmatprep.subr.bf16.mxu0 0
      %1351 = vmatpush1.bf16.msra.mxu0 0
      %1352 = vmatprep.subr.bf16.mxu0 0
      %1353 = vmatpush1.bf16.msra.mxu0 0
      %1354 = vmatprep.subr.bf16.mxu0 0
      %1355 = vmatpush1.bf16.msra.mxu0 0
      %1356 = vmatprep.subr.bf16.mxu0 0
      %1357 = vmatpush1.bf16.msra.mxu0 0
      %1358 = vmatprep.subr.bf16.mxu0 0
      %1359 = vmatpush1.bf16.msra.mxu0 0
      %1360 = vmatprep.subr.bf16.mxu0 0
      %1361 = vmatpush1.bf16.msra.mxu0 0
      %1362 = vmatprep.subr.bf16.mxu0 0
      %1363 = vmatpush1.bf16.msra.mxu0 0
      %1364 = vmatprep.mubr.bf16.mxu0 0
      %1365 = vmatmul.mubr.bf16.gmra.mrb[0].mxu0 %v1076
      %v1366 = vpop.f32.mrb[0].mxu0
      %v1367 = vadd.f32 %v1313, %v1366
      %v1368 = vpop.f32.mrb[0].mxu0
      %v1369 = vpop.f32.mrb[0].mxu0
      %v1370 = vpop.f32.mrb[0].mxu0
      %1371 = vdwg.mxu0
      %v1376 = vunpack.c.l.b16 %v1302
      %v1377 = vunpack.c.l.b16 %v1303
      %v1378 = vunpack.c.l.b16 %v1304
      %v1379 = vunpack.c.l.b16 %v1305
      %v1380 = vpack.c.b16 %v1377, %v1376
      %v1381 = vpack.c.b16 %v1379, %v1378
      %1384 = vmatprep.subr.bf16.mxu0 0
      %1385 = vmatpush1.bf16.msra.mxu0 %v1380
      %1386 = vmatprep.subr.bf16.mxu0 0
      %1387 = vmatpush1.bf16.msra.mxu0 %v1381
      %1388 = vmatprep.subr.bf16.mxu0 0
      %1389 = vmatpush1.bf16.msra.mxu0 0
      %1390 = vmatprep.subr.bf16.mxu0 0
      %1391 = vmatpush1.bf16.msra.mxu0 0
      %1392 = vmatprep.subr.bf16.mxu0 0
      %1393 = vmatpush1.bf16.msra.mxu0 0
      %1394 = vmatprep.subr.bf16.mxu0 0
      %1395 = vmatpush1.bf16.msra.mxu0 0
      %1396 = vmatprep.subr.bf16.mxu0 0
      %1397 = vmatpush1.bf16.msra.mxu0 0
      %1398 = vmatprep.subr.bf16.mxu0 0
      %1399 = vmatpush1.bf16.msra.mxu0 0
      %1400 = vmatprep.subr.bf16.mxu0 0
      %1401 = vmatpush1.bf16.msra.mxu0 0
      %1402 = vmatprep.subr.bf16.mxu0 0
      %1403 = vmatpush1.bf16.msra.mxu0 0
      %1404 = vmatprep.subr.bf16.mxu0 0
      %1405 = vmatpush1.bf16.msra.mxu0 0
      %1406 = vmatprep.subr.bf16.mxu0 0
      %1407 = vmatpush1.bf16.msra.mxu0 0
      %1408 = vmatprep.subr.bf16.mxu0 0
      %1409 = vmatpush1.bf16.msra.mxu0 0
      %1410 = vmatprep.subr.bf16.mxu0 0
      %1411 = vmatpush1.bf16.msra.mxu0 0
      %1412 = vmatprep.subr.bf16.mxu0 0
      %1413 = vmatpush1.bf16.msra.mxu0 0
      %1414 = vmatprep.subr.bf16.mxu0 0
      %1415 = vmatpush1.bf16.msra.mxu0 0
      %1416 = vmatprep.mubr.bf16.mxu0 0
      %1417 = vmatmul.mubr.bf16.gmra.mrb[0].mxu0 %v1076
      %v1418 = vpop.f32.mrb[0].mxu0
      %v1419 = vadd.f32 %v1317, %v1418
      %v1420 = vpop.f32.mrb[0].mxu0
      %v1421 = vpop.f32.mrb[0].mxu0
      %v1422 = vpop.f32.mrb[0].mxu0
      %1423 = vdwg.mxu0
      %v1424 = vpack.c.bf16 %v1170, %v1170
      %v1425 = vpack.c.bf16 %v1171, %v1171
      %v1426 = vpack.c.bf16 %v1241, %v1241
      %v1427 = vpack.c.bf16 %v1293, %v1293
      %vm1428 = vcmask 130048
      %v1430 = vsel %vm1428, %v1424, 0
      %v1433 = vsel %vm1428, %v1426, 0
      %1435 = vmatprep.subr.bf16.mxu0 0
      %1436 = vmatpush1.bf16.xpose.msra.mxu0 %v1433
      %1437 = vmatprep.subr.bf16.mxu0 0
      %1438 = vmatpush1.bf16.xpose.msra.mxu0 0
      %1439 = vmatprep.subr.bf16.mxu0 0
      %1440 = vmatpush1.bf16.xpose.msra.mxu0 0
      %1441 = vmatprep.subr.bf16.mxu0 0
      %1442 = vmatpush1.bf16.xpose.msra.mxu0 0
      %1443 = vmatprep.subr.bf16.mxu0 0
      %1444 = vmatpush1.bf16.xpose.msra.mxu0 0
      %1445 = vmatprep.subr.bf16.mxu0 0
      %1446 = vmatpush1.bf16.xpose.msra.mxu0 0
      %1447 = vmatprep.subr.bf16.mxu0 0
      %1448 = vmatpush1.bf16.xpose.msra.mxu0 0
      %1449 = vmatprep.subr.bf16.mxu0 0
      %1450 = vmatpush1.bf16.xpose.msra.mxu0 0
      %1451 = vmatprep.subr.bf16.mxu0 0
      %1452 = vmatpush1.bf16.xpose.msra.mxu0 0
      %1453 = vmatprep.subr.bf16.mxu0 0
      %1454 = vmatpush1.bf16.xpose.msra.mxu0 0
      %1455 = vmatprep.subr.bf16.mxu0 0
      %1456 = vmatpush1.bf16.xpose.msra.mxu0 0
      %1457 = vmatprep.subr.bf16.mxu0 0
      %1458 = vmatpush1.bf16.xpose.msra.mxu0 0
      %1459 = vmatprep.subr.bf16.mxu0 0
      %1460 = vmatpush1.bf16.xpose.msra.mxu0 0
      %1461 = vmatprep.subr.bf16.mxu0 0
      %1462 = vmatpush1.bf16.xpose.msra.mxu0 0
      %1463 = vmatprep.subr.bf16.mxu0 0
      %1464 = vmatpush1.bf16.xpose.msra.mxu0 0
      %1465 = vmatprep.subr.bf16.mxu0 0
      %1466 = vmatpush1.bf16.xpose.msra.mxu0 0
      %1467 = vmatprep.mubr.bf16.mxu0 0
      %1468 = vmatmul.mubr.bf16.gmra.mrb[0].mxu0 %v1430
      %v1469 = vpop.f32.mrb[0].mxu0
      %v1470 = vadd.f32 %v1039, %v1469
      %v1471 = vpop.f32.mrb[0].mxu0
      %v1472 = vpop.f32.mrb[0].mxu0
      %v1473 = vpop.f32.mrb[0].mxu0
      %1474 = vdwg.mxu0
      %v1476 = vsel %vm1428, %v1425, 0
      %v1479 = vsel %vm1428, %v1427, 0
      %1481 = vmatprep.subr.bf16.mxu0 0
      %1482 = vmatpush1.bf16.xpose.msra.mxu0 %v1479
      %1483 = vmatprep.subr.bf16.mxu0 0
      %1484 = vmatpush1.bf16.xpose.msra.mxu0 0
      %1485 = vmatprep.subr.bf16.mxu0 0
      %1486 = vmatpush1.bf16.xpose.msra.mxu0 0
      %1487 = vmatprep.subr.bf16.mxu0 0
      %1488 = vmatpush1.bf16.xpose.msra.mxu0 0
      %1489 = vmatprep.subr.bf16.mxu0 0
      %1490 = vmatpush1.bf16.xpose.msra.mxu0 0
      %1491 = vmatprep.subr.bf16.mxu0 0
      %1492 = vmatpush1.bf16.xpose.msra.mxu0 0
      %1493 = vmatprep.subr.bf16.mxu0 0
      %1494 = vmatpush1.bf16.xpose.msra.mxu0 0
      %1495 = vmatprep.subr.bf16.mxu0 0
      %1496 = vmatpush1.bf16.xpose.msra.mxu0 0
      %1497 = vmatprep.subr.bf16.mxu0 0
      %1498 = vmatpush1.bf16.xpose.msra.mxu0 0
      %1499 = vmatprep.subr.bf16.mxu0 0
      %1500 = vmatpush1.bf16.xpose.msra.mxu0 0
      %1501 = vmatprep.subr.bf16.mxu0 0
      %1502 = vmatpush1.bf16.xpose.msra.mxu0 0
      %1503 = vmatprep.subr.bf16.mxu0 0
      %1504 = vmatpush1.bf16.xpose.msra.mxu0 0
      %1505 = vmatprep.subr.bf16.mxu0 0
      %1506 = vmatpush1.bf16.xpose.msra.mxu0 0
      %1507 = vmatprep.subr.bf16.mxu0 0
      %1508 = vmatpush1.bf16.xpose.msra.mxu0 0
      %1509 = vmatprep.subr.bf16.mxu0 0
      %1510 = vmatpush1.bf16.xpose.msra.mxu0 0
      %1511 = vmatprep.subr.bf16.mxu0 0
      %1512 = vmatpush1.bf16.xpose.msra.mxu0 0
      %1513 = vmatprep.mubr.bf16.mxu0 0
      %1514 = vmatmul.mubr.bf16.gmra.mrb[0].mxu0 %v1476
      %v1515 = vpop.f32.mrb[0].mxu0
      %v1516 = vadd.f32 %v1039, %v1515
      %v1517 = vpop.f32.mrb[0].mxu0
      %v1518 = vpop.f32.mrb[0].mxu0
      %v1519 = vpop.f32.mrb[0].mxu0
      %1520 = vdwg.mxu0
      %vm1521 = vcmask 64512
      %v1522 = vsel %vm1521, %v1470, -inf
      %1523 = vmax.xlane.f32.xlu0 %v1522
      %v1524 = vpop.xlane.xlu0 %1523
      %v1525 = vsel %vm1521, %v1516, -inf
      %1526 = vmax.xlane.f32.xlu0 %v1525
      %v1527 = vpop.xlane.xlu0 %1526
      %v1528 = vsub.f32 %v1470, %v1524
      %v1529 = vsub.f32 %v1516, %v1527
      %v1530 = vmul.f32 %v1528, 1.442695
      %v1531 = vpow.pop %v1530
      %v1532 = vmul.f32 %v1529, 1.442695
      %v1533 = vpow.pop %v1532
      %v1534 = vsel %vm1521, %v1531, 0.0
      %1535 = vadd.xlane.f32.xlu0 %v1534
      %v1536 = vpop.xlane.xlu0 %1535
      %v1537 = vsel %vm1521, %v1533, 0.0
      %1538 = vadd.xlane.f32.xlu0 %v1537
      %v1539 = vpop.xlane.xlu0 %1538
      %v1540 = vrcp.pop %v1536
      %v1541 = vmul.f32 %v1531, %v1540
      %v1542 = vrcp.pop %v1539
      %v1543 = vmul.f32 %v1533, %v1542
      %v1544 = vpack.c.bf16 %v1541, %v1541
      %v1545 = vpack.c.bf16 %v1543, %v1543
      %v1546 = vpack.c.bf16 %v1367, %v1367
      %v1547 = vpack.c.bf16 %v1419, %v1419
      %v1549 = vsel %vm1521, %v1544, 0
      %vm1551 = vcmask 1043456
      %v1553 = vsel %vm1551, %v1546, 0
      %1555 = vmatprep.subr.bf16.mxu0 0
      %1556 = vmatpush1.bf16.msra.mxu0 %v1553
      %1557 = vmatprep.subr.bf16.mxu0 0
      %1558 = vmatpush1.bf16.msra.mxu0 0
      %1559 = vmatprep.subr.bf16.mxu0 0
      %1560 = vmatpush1.bf16.msra.mxu0 0
      %1561 = vmatprep.subr.bf16.mxu0 0
      %1562 = vmatpush1.bf16.msra.mxu0 0
      %1563 = vmatprep.subr.bf16.mxu0 0
      %1564 = vmatpush1.bf16.msra.mxu0 0
      %1565 = vmatprep.subr.bf16.mxu0 0
      %1566 = vmatpush1.bf16.msra.mxu0 0
      %1567 = vmatprep.subr.bf16.mxu0 0
      %1568 = vmatpush1.bf16.msra.mxu0 0
      %1569 = vmatprep.subr.bf16.mxu0 0
      %1570 = vmatpush1.bf16.msra.mxu0 0
      %1571 = vmatprep.subr.bf16.mxu0 0
      %1572 = vmatpush1.bf16.msra.mxu0 0
      %1573 = vmatprep.subr.bf16.mxu0 0
      %1574 = vmatpush1.bf16.msra.mxu0 0
      %1575 = vmatprep.subr.bf16.mxu0 0
      %1576 = vmatpush1.bf16.msra.mxu0 0
      %1577 = vmatprep.subr.bf16.mxu0 0
      %1578 = vmatpush1.bf16.msra.mxu0 0
      %1579 = vmatprep.subr.bf16.mxu0 0
      %1580 = vmatpush1.bf16.msra.mxu0 0
      %1581 = vmatprep.subr.bf16.mxu0 0
      %1582 = vmatpush1.bf16.msra.mxu0 0
      %1583 = vmatprep.subr.bf16.mxu0 0
      %1584 = vmatpush1.bf16.msra.mxu0 0
      %1585 = vmatprep.subr.bf16.mxu0 0
      %1586 = vmatpush1.bf16.msra.mxu0 0
      %1587 = vmatprep.mubr.bf16.mxu0 0
      %1588 = vmatmul.mubr.bf16.gmra.mrb[0].mxu0 %v1549
      %v1589 = vpop.f32.mrb[0].mxu0
      %v1590 = vadd.f32 0.0, %v1589
      %v1591 = vpop.f32.mrb[0].mxu0
      %v1592 = vpop.f32.mrb[0].mxu0
      %v1593 = vpop.f32.mrb[0].mxu0
      %1594 = vdwg.mxu0
      %v1596 = vsel %vm1521, %v1545, 0
      %v1599 = vsel %vm1551, %v1547, 0
      %1601 = vmatprep.subr.bf16.mxu0 0
      %1602 = vmatpush1.bf16.msra.mxu0 %v1599
      %1603 = vmatprep.subr.bf16.mxu0 0
      %1604 = vmatpush1.bf16.msra.mxu0 0
      %1605 = vmatprep.subr.bf16.mxu0 0
      %1606 = vmatpush1.bf16.msra.mxu0 0
      %1607 = vmatprep.subr.bf16.mxu0 0
      %1608 = vmatpush1.bf16.msra.mxu0 0
      %1609 = vmatprep.subr.bf16.mxu0 0
      %1610 = vmatpush1.bf16.msra.mxu0 0
      %1611 = vmatprep.subr.bf16.mxu0 0
      %1612 = vmatpush1.bf16.msra.mxu0 0
      %1613 = vmatprep.subr.bf16.mxu0 0
      %1614 = vmatpush1.bf16.msra.mxu0 0
      %1615 = vmatprep.subr.bf16.mxu0 0
      %1616 = vmatpush1.bf16.msra.mxu0 0
      %1617 = vmatprep.subr.bf16.mxu0 0
      %1618 = vmatpush1.bf16.msra.mxu0 0
      %1619 = vmatprep.subr.bf16.mxu0 0
      %1620 = vmatpush1.bf16.msra.mxu0 0
      %1621 = vmatprep.subr.bf16.mxu0 0
      %1622 = vmatpush1.bf16.msra.mxu0 0
      %1623 = vmatprep.subr.bf16.mxu0 0
      %1624 = vmatpush1.bf16.msra.mxu0 0
      %1625 = vmatprep.subr.bf16.mxu0 0
      %1626 = vmatpush1.bf16.msra.mxu0 0
      %1627 = vmatprep.subr.bf16.mxu0 0
      %1628 = vmatpush1.bf16.msra.mxu0 0
      %1629 = vmatprep.subr.bf16.mxu0 0
      %1630 = vmatpush1.bf16.msra.mxu0 0
      %1631 = vmatprep.subr.bf16.mxu0 0
      %1632 = vmatpush1.bf16.msra.mxu0 0
      %1633 = vmatprep.mubr.bf16.mxu0 0
      %1634 = vmatmul.mubr.bf16.gmra.mrb[0].mxu0 %v1596
      %v1635 = vpop.f32.mrb[0].mxu0
      %v1636 = vadd.f32 0.0, %v1635
      %v1637 = vpop.f32.mrb[0].mxu0
      %v1638 = vpop.f32.mrb[0].mxu0
      %v1639 = vpop.f32.mrb[0].mxu0
      %1640 = vdwg.mxu0
      %v1641 = vpack.c.bf16 %v1590, %v1590
      %v1642 = vpack.c.bf16 %v1636, %v1636
      %v1643 = vld [vmem:[%s958] sm:$0xf]
      %v1644 = vld [vmem:[%s958 + $0x4] sm:$0xf]
      %v1645 = vld [vmem:[%s958 + $0x8] sm:$0xf]
      %v1646 = vld [vmem:[%s958 + $0xc] sm:$0xf]
      %v1649 = vunpack.c.l.b16 %v1643
      %v1650 = vunpack.c.l.b16 %v1644
      %v1651 = vpack.c.b16 %v1650, %v1649
      %v1654 = vsel %vm1428, %v1641, 0
      %1656 = vmatprep.subr.bf16.mxu0 0
      %1657 = vmatpush1.bf16.msra.mxu0 %v1651
      %1658 = vmatprep.subr.bf16.mxu0 0
      %1659 = vmatpush1.bf16.msra.mxu0 0
      %1660 = vmatprep.subr.bf16.mxu0 0
      %1661 = vmatpush1.bf16.msra.mxu0 0
      %1662 = vmatprep.subr.bf16.mxu0 0
      %1663 = vmatpush1.bf16.msra.mxu0 0
      %1664 = vmatprep.subr.bf16.mxu0 0
      %1665 = vmatpush1.bf16.msra.mxu0 0
      %1666 = vmatprep.subr.bf16.mxu0 0
      %1667 = vmatpush1.bf16.msra.mxu0 0
      %1668 = vmatprep.subr.bf16.mxu0 0
      %1669 = vmatpush1.bf16.msra.mxu0 0
      %1670 = vmatprep.subr.bf16.mxu0 0
      %1671 = vmatpush1.bf16.msra.mxu0 0
      %1672 = vmatprep.subr.bf16.mxu0 0
      %1673 = vmatpush1.bf16.msra.mxu0 0
      %1674 = vmatprep.subr.bf16.mxu0 0
      %1675 = vmatpush1.bf16.msra.mxu0 0
      %1676 = vmatprep.subr.bf16.mxu0 0
      %1677 = vmatpush1.bf16.msra.mxu0 0
      %1678 = vmatprep.subr.bf16.mxu0 0
      %1679 = vmatpush1.bf16.msra.mxu0 0
      %1680 = vmatprep.subr.bf16.mxu0 0
      %1681 = vmatpush1.bf16.msra.mxu0 0
      %1682 = vmatprep.subr.bf16.mxu0 0
      %1683 = vmatpush1.bf16.msra.mxu0 0
      %1684 = vmatprep.subr.bf16.mxu0 0
      %1685 = vmatpush1.bf16.msra.mxu0 0
      %1686 = vmatprep.subr.bf16.mxu0 0
      %1687 = vmatpush1.bf16.msra.mxu0 0
      %1688 = vmatprep.mubr.bf16.mxu0 0
      %1689 = vmatmul.mubr.bf16.gmra.mrb[0].mxu0 %v1654
      %v1690 = vpop.f32.mrb[0].mxu0
      %v1691 = vadd.f32 0.0, %v1690
      %v1692 = vpop.f32.mrb[0].mxu0
      %v1693 = vpop.f32.mrb[0].mxu0
      %v1694 = vpop.f32.mrb[0].mxu0
      %1695 = vdwg.mxu0
      %v1698 = vunpack.c.l.b16 %v1645
      %v1699 = vunpack.c.l.b16 %v1646
      %v1700 = vpack.c.b16 %v1699, %v1698
      %v1703 = vsel %vm1428, %v1642, 0
      %1705 = vmatprep.subr.bf16.mxu0 0
      %1706 = vmatpush1.bf16.msra.mxu0 %v1700
      %1707 = vmatprep.subr.bf16.mxu0 0
      %1708 = vmatpush1.bf16.msra.mxu0 0
      %1709 = vmatprep.subr.bf16.mxu0 0
      %1710 = vmatpush1.bf16.msra.mxu0 0
      %1711 = vmatprep.subr.bf16.mxu0 0
      %1712 = vmatpush1.bf16.msra.mxu0 0
      %1713 = vmatprep.subr.bf16.mxu0 0
      %1714 = vmatpush1.bf16.msra.mxu0 0
      %1715 = vmatprep.subr.bf16.mxu0 0
      %1716 = vmatpush1.bf16.msra.mxu0 0
      %1717 = vmatprep.subr.bf16.mxu0 0
      %1718 = vmatpush1.bf16.msra.mxu0 0
      %1719 = vmatprep.subr.bf16.mxu0 0
      %1720 = vmatpush1.bf16.msra.mxu0 0
      %1721 = vmatprep.subr.bf16.mxu0 0
      %1722 = vmatpush1.bf16.msra.mxu0 0
      %1723 = vmatprep.subr.bf16.mxu0 0
      %1724 = vmatpush1.bf16.msra.mxu0 0
      %1725 = vmatprep.subr.bf16.mxu0 0
      %1726 = vmatpush1.bf16.msra.mxu0 0
      %1727 = vmatprep.subr.bf16.mxu0 0
      %1728 = vmatpush1.bf16.msra.mxu0 0
      %1729 = vmatprep.subr.bf16.mxu0 0
      %1730 = vmatpush1.bf16.msra.mxu0 0
      %1731 = vmatprep.subr.bf16.mxu0 0
      %1732 = vmatpush1.bf16.msra.mxu0 0
      %1733 = vmatprep.subr.bf16.mxu0 0
      %1734 = vmatpush1.bf16.msra.mxu0 0
      %1735 = vmatprep.subr.bf16.mxu0 0
      %1736 = vmatpush1.bf16.msra.mxu0 0
      %1737 = vmatprep.mubr.bf16.mxu0 0
      %1738 = vmatmul.mubr.bf16.gmra.mrb[0].mxu0 %v1703
      %v1739 = vpop.f32.mrb[0].mxu0
      %v1740 = vadd.f32 0.0, %v1739
      %v1741 = vpop.f32.mrb[0].mxu0
      %v1742 = vpop.f32.mrb[0].mxu0
      %v1743 = vpop.f32.mrb[0].mxu0
      %1744 = vdwg.mxu0
      %v1745 = vsel %vm1074, %v1691, 0.0
      %v1746 = vsel %vm1074, %v1740, 0.0
      %v1747 = vadd.f32 %v1745, %v1746
      %v1748 = vld [vmem:[%s961] sm:$0x1]
      %v1750 = vlaneseq
      %v1751 = vshrl.u32 %v1750, 7
      %v1752 = vsub.s32 0, %v1751
      %v1753 = vrot.slane %v1748, %v1752
      %v1755 = vadd.f32 %v1747, %v1753
      %v1756 = vadd.f32 %v1032, %v1755
      %v1757 = vld [vmem:[%s964] sm:$0x1]
      %v1758 = vld [vmem:[%s967] sm:$0x1]
      %v1759 = vsel %vm1074, %v1756, 0.0
      %1760 = vadd.xlane.f32.xlu0 %v1759
      %v1761 = vpop.xlane.xlu0 %1760
      %v1762 = vrcp.pop 32.0
      %v1763 = vmul.f32 %v1761, %v1762
      %v1764 = vsub.f32 %v1756, %v1763
      %v1765 = vmul.f32 %v1764, %v1764
      %v1766 = vsel %vm1074, %v1765, 0.0
      %1767 = vadd.xlane.f32.xlu0 %v1766
      %v1768 = vpop.xlane.xlu0 %1767
      %v1769 = vmul.f32 %v1768, %v1762
      %v1770 = vadd.f32 %v1769, 1e-12
      %v1771 = vrsqrt.pop %v1770
      %v1772 = vmul.f32 %v1764, %v1771
      %v1774 = vlaneseq
      %v1775 = vshrl.u32 %v1774, 7
      %v1776 = vsub.s32 0, %v1775
      %v1777 = vrot.slane %v1757, %v1776
      %v1779 = vmul.f32 %v1772, %v1777
      %v1781 = vlaneseq
      %v1782 = vshrl.u32 %v1781, 7
      %v1783 = vsub.s32 0, %v1782
      %v1784 = vrot.slane %v1758, %v1783
      %v1786 = vadd.f32 %v1779, %v1784
      %v1787 = vpack.c.bf16 %v1786, %v1786
      %v1788 = vld [vmem:[%s972] sm:$0xf]
      %v1789 = vld [vmem:[%s972 + $0x4] sm:$0xf]
      %v1790 = vld [vmem:[%s972 + $0x8] sm:$0xf]
      %v1791 = vld [vmem:[%s972 + $0xc] sm:$0xf]
      %v1792 = vld [vmem:[%s975] sm:$0x1]
      %v1794 = vlaneseq
      %v1795 = vshrl.u32 %v1794, 7
      %v1796 = vsub.s32 0, %v1795
      %v1797 = vrot.slane %v1792, %v1796
      %v1803 = vunpack.c.l.b16 %v1788
      %v1804 = vunpack.c.l.b16 %v1789
      %v1805 = vunpack.c.l.b16 %v1790
      %v1806 = vunpack.c.l.b16 %v1791
      %v1807 = vpack.c.b16 %v1804, %v1803
      %v1808 = vpack.c.b16 %v1806, %v1805
      %v1812 = vsel %vm1074, %v1787, 0
      %1814 = vmatprep.subr.bf16.mxu0 0
      %1815 = vmatpush1.bf16.msra.mxu0 %v1807
      %1816 = vmatprep.subr.bf16.mxu0 0
      %1817 = vmatpush1.bf16.msra.mxu0 %v1808
      %1818 = vmatprep.subr.bf16.mxu0 0
      %1819 = vmatpush1.bf16.msra.mxu0 0
      %1820 = vmatprep.subr.bf16.mxu0 0
      %1821 = vmatpush1.bf16.msra.mxu0 0
      %1822 = vmatprep.subr.bf16.mxu0 0
      %1823 = vmatpush1.bf16.msra.mxu0 0
      %1824 = vmatprep.subr.bf16.mxu0 0
      %1825 = vmatpush1.bf16.msra.mxu0 0
      %1826 = vmatprep.subr.bf16.mxu0 0
      %1827 = vmatpush1.bf16.msra.mxu0 0
      %1828 = vmatprep.subr.bf16.mxu0 0
      %1829 = vmatpush1.bf16.msra.mxu0 0
      %1830 = vmatprep.subr.bf16.mxu0 0
      %1831 = vmatpush1.bf16.msra.mxu0 0
      %1832 = vmatprep.subr.bf16.mxu0 0
      %1833 = vmatpush1.bf16.msra.mxu0 0
      %1834 = vmatprep.subr.bf16.mxu0 0
      %1835 = vmatpush1.bf16.msra.mxu0 0
      %1836 = vmatprep.subr.bf16.mxu0 0
      %1837 = vmatpush1.bf16.msra.mxu0 0
      %1838 = vmatprep.subr.bf16.mxu0 0
      %1839 = vmatpush1.bf16.msra.mxu0 0
      %1840 = vmatprep.subr.bf16.mxu0 0
      %1841 = vmatpush1.bf16.msra.mxu0 0
      %1842 = vmatprep.subr.bf16.mxu0 0
      %1843 = vmatpush1.bf16.msra.mxu0 0
      %1844 = vmatprep.subr.bf16.mxu0 0
      %1845 = vmatpush1.bf16.msra.mxu0 0
      %1846 = vmatprep.mubr.bf16.mxu0 0
      %1847 = vmatmul.mubr.bf16.gmra.mrb[0].mxu0 %v1812
      %v1848 = vpop.f32.mrb[0].mxu0
      %v1849 = vadd.f32 %v1797, %v1848
      %v1850 = vpop.f32.mrb[0].mxu0
      %v1851 = vpop.f32.mrb[0].mxu0
      %v1852 = vpop.f32.mrb[0].mxu0
      %1853 = vdwg.mxu0
      %v1854 = vmul.f32 %v1849, %v1849
      %v1855 = vmul.f32 %v1849, %v1854
      %v1856 = vmul.f32 %v1855, 0.044715
      %v1857 = vadd.f32 %v1849, %v1856
      %v1858 = vmul.f32 %v1857, 0.7978846
      %v1859 = vtanh.pop %v1858
      %v1860 = vadd.f32 %v1859, 1.0
      %v1861 = vmul.f32 %v1860, 0.5
      %v1862 = vmul.f32 %v1849, %v1861
      %v1863 = vpack.c.bf16 %v1862, %v1862
      %v1864 = vld [vmem:[%s980] sm:$0xf]
      %v1865 = vld [vmem:[%s980 + $0x4] sm:$0xf]
      %v1866 = vld [vmem:[%s980 + $0x8] sm:$0xf]
      %v1867 = vld [vmem:[%s980 + $0xc] sm:$0xf]
      %v1868 = vld [vmem:[%s980 + $0x10] sm:$0xf]
      %v1869 = vld [vmem:[%s980 + $0x14] sm:$0xf]
      %v1870 = vld [vmem:[%s980 + $0x18] sm:$0xf]
      %v1871 = vld [vmem:[%s980 + $0x1c] sm:$0xf]
      %v1872 = vld [vmem:[%s983] sm:$0x1]
      %v1874 = vlaneseq
      %v1875 = vshrl.u32 %v1874, 7
      %v1876 = vsub.s32 0, %v1875
      %v1877 = vrot.slane %v1872, %v1876
      %v1887 = vunpack.c.l.b16 %v1864
      %v1888 = vunpack.c.l.b16 %v1865
      %v1889 = vunpack.c.l.b16 %v1866
      %v1890 = vunpack.c.l.b16 %v1867
      %v1891 = vunpack.c.l.b16 %v1868
      %v1892 = vunpack.c.l.b16 %v1869
      %v1893 = vunpack.c.l.b16 %v1870
      %v1894 = vunpack.c.l.b16 %v1871
      %v1895 = vpack.c.b16 %v1888, %v1887
      %v1896 = vpack.c.b16 %v1890, %v1889
      %v1897 = vpack.c.b16 %v1892, %v1891
      %v1898 = vpack.c.b16 %v1894, %v1893
      %vm1903 = vcmask 523264
      %v1905 = vsel %vm1903, %v1863, 0
      %1907 = vmatprep.subr.bf16.mxu0 0
      %1908 = vmatpush1.bf16.msra.mxu0 %v1895
      %1909 = vmatprep.subr.bf16.mxu0 0
      %1910 = vmatpush1.bf16.msra.mxu0 %v1896
      %1911 = vmatprep.subr.bf16.mxu0 0
      %1912 = vmatpush1.bf16.msra.mxu0 %v1897
      %1913 = vmatprep.subr.bf16.mxu0 0
      %1914 = vmatpush1.bf16.msra.mxu0 %v1898
      %1915 = vmatprep.subr.bf16.mxu0 0
      %1916 = vmatpush1.bf16.msra.mxu0 0
      %1917 = vmatprep.subr.bf16.mxu0 0
      %1918 = vmatpush1.bf16.msra.mxu0 0
      %1919 = vmatprep.subr.bf16.mxu0 0
      %1920 = vmatpush1.bf16.msra.mxu0 0
      %1921 = vmatprep.subr.bf16.mxu0 0
      %1922 = vmatpush1.bf16.msra.mxu0 0
      %1923 = vmatprep.subr.bf16.mxu0 0
      %1924 = vmatpush1.bf16.msra.mxu0 0
      %1925 = vmatprep.subr.bf16.mxu0 0
      %1926 = vmatpush1.bf16.msra.mxu0 0
      %1927 = vmatprep.subr.bf16.mxu0 0
      %1928 = vmatpush1.bf16.msra.mxu0 0
      %1929 = vmatprep.subr.bf16.mxu0 0
      %1930 = vmatpush1.bf16.msra.mxu0 0
      %1931 = vmatprep.subr.bf16.mxu0 0
      %1932 = vmatpush1.bf16.msra.mxu0 0
      %1933 = vmatprep.subr.bf16.mxu0 0
      %1934 = vmatpush1.bf16.msra.mxu0 0
      %1935 = vmatprep.subr.bf16.mxu0 0
      %1936 = vmatpush1.bf16.msra.mxu0 0
      %1937 = vmatprep.subr.bf16.mxu0 0
      %1938 = vmatpush1.bf16.msra.mxu0 0
      %1939 = vmatprep.mubr.bf16.mxu0 0
      %1940 = vmatmul.mubr.bf16.gmra.mrb[0].mxu0 %v1905
      %v1941 = vpop.f32.mrb[0].mxu0
      %v1942 = vadd.f32 %v1877, %v1941
      %v1943 = vpop.f32.mrb[0].mxu0
      %v1944 = vpop.f32.mrb[0].mxu0
      %v1945 = vpop.f32.mrb[0].mxu0
      %1946 = vdwg.mxu0
      %v1947 = vadd.f32 %v1786, %v1942
      %v1948 = vld [vmem:[%s986] sm:$0x1]
      %v1949 = vld [vmem:[%s989] sm:$0x1]
      %v1950 = vsel %vm1074, %v1947, 0.0
      %1951 = vadd.xlane.f32.xlu0 %v1950
      %v1952 = vpop.xlane.xlu0 %1951
      %v1953 = vmul.f32 %v1952, %v1762
      %v1954 = vsub.f32 %v1947, %v1953
      %v1955 = vmul.f32 %v1954, %v1954
      %v1956 = vsel %vm1074, %v1955, 0.0
      %1957 = vadd.xlane.f32.xlu0 %v1956
      %v1958 = vpop.xlane.xlu0 %1957
      %v1959 = vmul.f32 %v1958, %v1762
      %v1960 = vadd.f32 %v1959, 1e-12
      %v1961 = vrsqrt.pop %v1960
      %v1962 = vmul.f32 %v1954, %v1961
      %v1964 = vlaneseq
      %v1965 = vshrl.u32 %v1964, 7
      %v1966 = vsub.s32 0, %v1965
      %v1967 = vrot.slane %v1948, %v1966
      %v1969 = vmul.f32 %v1962, %v1967
      %v1971 = vlaneseq
      %v1972 = vshrl.u32 %v1971, 7
      %v1973 = vsub.s32 0, %v1972
      %v1974 = vrot.slane %v1949, %v1973
      %v1976 = vadd.f32 %v1969, %v1974
      %1977 = vst.msk [vmem:[#allocation2] sm:$0xff] %vm1074, %v1976
      %p1978 = scmp.eq.s32.totalorder %s46, 1
      // Predicated region
      $region117: #{bert_classifier_forward.1} parent=111 // pred_check
        %p1979 = pneg %p1978
      $region118: #{bert_classifier_forward.1} parent=111 // pred_check_branch
        %1981 = sbr.rel (%p1979) target = $region120
      $region119: #{bert_classifier_forward.1} parent=111 // pred_region
        %v1982 = vpack.c.bf16 %v1976, %v1976
        %v1983 = vld [vmem:[%s20] sm:$0xf]
        %v1984 = vld [vmem:[%s20 + $0x4] sm:$0xf]
        %v1985 = vld [vmem:[%s20 + $0x8] sm:$0xf]
        %v1986 = vld [vmem:[%s20 + $0xc] sm:$0xf]
        %v1987 = vld [vmem:[%s21] sm:$0x1]
        %v1992 = vunpack.c.l.b16 %v1983
        %v1993 = vunpack.c.l.b16 %v1984
        %v1994 = vunpack.c.l.b16 %v1985
        %v1995 = vunpack.c.l.b16 %v1986
        %v1996 = vpack.c.b16 %v1993, %v1992
        %v1997 = vpack.c.b16 %v1995, %v1994
        %v2001 = vsel %vm1074, %v1982, 0
        %2003 = vmatprep.subr.bf16.mxu0 0
        %2004 = vmatpush1.bf16.msra.mxu0 %v1996
        %2005 = vmatprep.subr.bf16.mxu0 0
        %2006 = vmatpush1.bf16.msra.mxu0 %v1997
        %2007 = vmatprep.subr.bf16.mxu0 0
        %2008 = vmatpush1.bf16.msra.mxu0 0
        %2009 = vmatprep.subr.bf16.mxu0 0
        %2010 = vmatpush1.bf16.msra.mxu0 0
        %2011 = vmatprep.subr.bf16.mxu0 0
        %2012 = vmatpush1.bf16.msra.mxu0 0
        %2013 = vmatprep.subr.bf16.mxu0 0
        %2014 = vmatpush1.bf16.msra.mxu0 0
        %2015 = vmatprep.subr.bf16.mxu0 0
        %2016 = vmatpush1.bf16.msra.mxu0 0
        %2017 = vmatprep.subr.bf16.mxu0 0
        %2018 = vmatpush1.bf16.msra.mxu0 0
        %2019 = vmatprep.subr.bf16.mxu0 0
        %2020 = vmatpush1.bf16.msra.mxu0 0
        %2021 = vmatprep.subr.bf16.mxu0 0
        %2022 = vmatpush1.bf16.msra.mxu0 0
        %2023 = vmatprep.subr.bf16.mxu0 0
        %2024 = vmatpush1.bf16.msra.mxu0 0
        %2025 = vmatprep.subr.bf16.mxu0 0
        %2026 = vmatpush1.bf16.msra.mxu0 0
        %2027 = vmatprep.subr.bf16.mxu0 0
        %2028 = vmatpush1.bf16.msra.mxu0 0
        %2029 = vmatprep.subr.bf16.mxu0 0
        %2030 = vmatpush1.bf16.msra.mxu0 0
        %2031 = vmatprep.subr.bf16.mxu0 0
        %2032 = vmatpush1.bf16.msra.mxu0 0
        %2033 = vmatprep.subr.bf16.mxu0 0
        %2034 = vmatpush1.bf16.msra.mxu0 0
        %2035 = vmatprep.mubr.bf16.mxu0 0
        %2036 = vmatmul.mubr.bf16.gmra.mrb[0].mxu0 %v2001
        %v2037 = vpop.f32.mrb[0].mxu0
        %v2038 = vadd.f32 %v1987, %v2037
        %v2039 = vpop.f32.mrb[0].mxu0
        %v2040 = vpop.f32.mrb[0].mxu0
        %v2041 = vpop.f32.mrb[0].mxu0
        %2042 = vdwg.mxu0
        %v2043 = vtanh.pop %v2038
        %v2044 = vpack.c.bf16 %v2043, %v2043
        %v2045 = vld [vmem:[%s22] sm:$0xf]
        %v2046 = vld [vmem:[%s22 + $0x4] sm:$0xf]
        %v2047 = vld [vmem:[%s22 + $0x8] sm:$0xf]
        %v2048 = vld [vmem:[%s22 + $0xc] sm:$0xf]
        %v2049 = vld [vmem:[%s23] sm:$0x1]
        %v2054 = vunpack.c.l.b16 %v2045
        %v2055 = vunpack.c.l.b16 %v2046
        %v2056 = vunpack.c.l.b16 %v2047
        %v2057 = vunpack.c.l.b16 %v2048
        %v2058 = vpack.c.b16 %v2055, %v2054
        %v2059 = vpack.c.b16 %v2057, %v2056
        %v2063 = vsel %vm1074, %v2044, 0
        %2065 = vmatprep.subr.bf16.mxu0 0
        %2066 = vmatpush1.bf16.msra.mxu0 %v2058
        %2067 = vmatprep.subr.bf16.mxu0 0
        %2068 = vmatpush1.bf16.msra.mxu0 %v2059
        %2069 = vmatprep.subr.bf16.mxu0 0
        %2070 = vmatpush1.bf16.msra.mxu0 0
        %2071 = vmatprep.subr.bf16.mxu0 0
        %2072 = vmatpush1.bf16.msra.mxu0 0
        %2073 = vmatprep.subr.bf16.mxu0 0
        %2074 = vmatpush1.bf16.msra.mxu0 0
        %2075 = vmatprep.subr.bf16.mxu0 0
        %2076 = vmatpush1.bf16.msra.mxu0 0
        %2077 = vmatprep.subr.bf16.mxu0 0
        %2078 = vmatpush1.bf16.msra.mxu0 0
        %2079 = vmatprep.subr.bf16.mxu0 0
        %2080 = vmatpush1.bf16.msra.mxu0 0
        %2081 = vmatprep.subr.bf16.mxu0 0
        %2082 = vmatpush1.bf16.msra.mxu0 0
        %2083 = vmatprep.subr.bf16.mxu0 0
        %2084 = vmatpush1.bf16.msra.mxu0 0
        %2085 = vmatprep.subr.bf16.mxu0 0
        %2086 = vmatpush1.bf16.msra.mxu0 0
        %2087 = vmatprep.subr.bf16.mxu0 0
        %2088 = vmatpush1.bf16.msra.mxu0 0
        %2089 = vmatprep.subr.bf16.mxu0 0
        %2090 = vmatpush1.bf16.msra.mxu0 0
        %2091 = vmatprep.subr.bf16.mxu0 0
        %2092 = vmatpush1.bf16.msra.mxu0 0
        %2093 = vmatprep.subr.bf16.mxu0 0
        %2094 = vmatpush1.bf16.msra.mxu0 0
        %2095 = vmatprep.subr.bf16.mxu0 0
        %2096 = vmatpush1.bf16.msra.mxu0 0
        %2097 = vmatprep.mubr.bf16.mxu0 0
        %2098 = vmatmul.mubr.bf16.gmra.mrb[0].mxu0 %v2063
        %v2099 = vpop.f32.mrb[0].mxu0
        %v2100 = vadd.f32 %v2049, %v2099
        %v2101 = vpop.f32.mrb[0].mxu0
        %v2102 = vpop.f32.mrb[0].mxu0
        %v2103 = vpop.f32.mrb[0].mxu0
        %2104 = vdwg.mxu0
        %v2105 = vlaneseq
        %v2106 = vshrl.u32 %v2105, 7
        %v2107 = vsub.s32 0, %v2106
        %v2108 = vrot.slane %v2100, %v2107
        %2109 = vst [vmem:[%s993] sm:$0xff] %v2108
      $region120: #{bert_classifier_forward.1} parent=111 // pred_fallthru
        _
      %p2110 = scmp.lt.s32.totalorder %s45, 1
      %s2111 = scalar_select %p2110, %s45, 1
      %s2112 = smul.addr %s2111, 8
      %s2113 = scalar_lea.vmem %s24, %s2112
      // Predicated region
      $region121: #{bert_classifier_forward.1} parent=111 // pred_check
        %p2114 = pneg %p639
      $region122: #{bert_classifier_forward.1} parent=111 // pred_check_branch
        %2116 = sbr.rel (%p2114) target = $region124
      $region123: #{bert_classifier_forward.1} parent=111 // pred_region
        _
      $region124: #{bert_classifier_forward.1} parent=111 // pred_fallthru
        _
    $region112: #{bert_classifier_forward.1} parent=5 // pred_fallthru
      _
    %p2117 = scmp.le.s32.totalorder 2, %s36
    // Predicated region
    $region125: #{bert_classifier_forward.1} parent=5 // pred_check
      %p2118 = pneg %p2117
    $region126: #{bert_classifier_forward.1} parent=5 // pred_check_branch
      %2120 = sbr.rel (%p2118) target = $region128
    $region127: #{bert_classifier_forward.1} parent=5 // pred_region
      %s2121 = ssub.s32 %s36, 2
      // Predicated region
      $region129: #{bert_classifier_forward.1} parent=127 // pred_check
        %p2122 = pneg %p645
      $region130: #{bert_classifier_forward.1} parent=127 // pred_check_branch
        %2124 = sbr.rel (%p2122) target = $region132
      $region131: #{bert_classifier_forward.1} parent=127 // pred_region
        %p2125 = scmp.lt.s32.totalorder %s47, 1
        %s2126 = scalar_select %p2125, %s47, 1
        %s2127 = smul.addr %s2126, 8
        %s2128 = scalar_lea.vmem %s24, %s2127
      $region132: #{bert_classifier_forward.1} parent=127 // pred_fallthru
        _
    $region128: #{bert_classifier_forward.1} parent=5 // pred_fallthru
      _
  $region6: #{bert_classifier_forward.1} parent=0 // loop_footer
    %s40 = sadd.s32 1, %s36
  $region7: #{bert_classifier_forward.1} parent=0 // loop_footer_branch
    %35 = sbr.rel target = $region3
  $region8: #{bert_classifier_forward.1} parent=0 // loop_exit
    _

</llo_original>
